<compile_context>
chip_gen: v7x
topology: tpu7x:2x2x1
jax: 0.10.0
libtpu: 0.0.40
codegen_flags: <defaults>
</compile_context>

<pallas_src>
import functools

import jax
import jax.numpy as jnp
from jax.experimental import pallas as pl
from jax.experimental.pallas import tpu as pltpu


def _rup(x, m):
    return ((x + m - 1) // m) * m


def _pad_to(x, shape):
    return jnp.pad(x, [(0, s - d) for s, d in zip(shape, x.shape)])


# -----------------------------------------------------------------------------
# Fused per-token decoder kernel.
#   grid = (Vp // tV,):  j == 0  -> embedding gather + attention + GRU step (feats, h_new)
#                        every j -> pred tile = feats @ fc_w_tile + fc_b_tile
# -----------------------------------------------------------------------------
def _decoder_step_kernel(ids_ref, hidden_ref, emb_hbm_ref, enc_ref, encproj_ref,
                         attn_v_ref, w_hid_ref, b_hid_ref, w_in_ref, b_in_ref,
                         fcw_ref, fcb_ref,
                         pred_ref, hid_out_ref,
                         emb_vmem, dma_sems, feats_ref, *, s_real):
    f32 = jnp.float32
    Bp, Hdp = hidden_ref.shape
    Sp, He2p = enc_ref.shape[1], enc_ref.shape[2]

    @pl.when(pl.program_id(0) == 0)
    def _step():
        # ---- embedding gather: per-row DMA straight from HBM; descriptors built ONCE
        # (scalar ids read before any .wait(), keeps sst->sld forwarding intact) ----
        copies = [
            pltpu.make_async_copy(
                emb_hbm_ref.at[pl.ds(ids_ref[b], 1), :],
                emb_vmem.at[pl.ds(b, 1), :],
                dma_sems.at[b])
            for b in range(Bp)
        ]
        for c in copies:
            c.start()

        hidden = hidden_ref[...]                                   # (Bp, Hdp) f32 state
        hid_c = hidden.astype(w_hid_ref.dtype)

        # ---- ONE fused hidden-side matmul: [attn_Wh | Whh_r | Whh_z | Whh_n] ----
        hh = jnp.dot(hid_c, w_hid_ref[...],
                     preferred_element_type=f32) + b_hid_ref[...]  # (Bp, 4*Hdp)
        ha = hh[:, :Hdp]                                           # attention query proj

        # ---- Bahdanau attention (enc @ W_e hoisted into precompute_encoder) ----
        energy = jnp.tanh(encproj_ref[...].astype(f32) + ha[:, None, :])     # (Bp,Sp,Hdp)
        scores = jnp.sum(energy * attn_v_ref[...].reshape(1, 1, Hdp), axis=-1)  # (Bp,Sp)
        if Sp != s_real:                      # static check: mask padded key positions
            smask = jax.lax.broadcasted_iota(jnp.int32, (Bp, Sp), 1) < s_real
            scores = jnp.where(smask, scores, -1e30)
        scores = scores - jnp.max(scores, axis=-1, keepdims=True)
        e = jnp.exp(scores)
        a = e / jnp.sum(e, axis=-1, keepdims=True)   # exact divide (logits may feed search)

        # ---- weighted = bmm(a, enc): VPU broadcast-mul + sublane reduce (no M=1 matvecs) ----
        weighted = jnp.sum(a[:, :, None] * enc_ref[...].astype(f32), axis=1)  # (Bp, He2p)

        for c in copies:
            c.wait()
        embedded = emb_vmem[...]                                   # (Bp, Ep) f32

        # feats = [h_new | weighted | embedded] at 128-aligned lane offsets: the fc_out
        # concat is realized purely by layout; [weighted | embedded] doubles as the GRU
        # input-side matmul operand (row order of w_in matches).
        feats_ref[:, Hdp:Hdp + He2p] = weighted
        feats_ref[:, Hdp + He2p:] = embedded
        xw = feats_ref[:, Hdp:].astype(w_in_ref.dtype)             # (Bp, He2p+Ep)

        # ---- ONE fused input-side matmul for all three GRU gates (r|z|n columns) ----
        gi = jnp.dot(xw, w_in_ref[...],
                     preferred_element_type=f32) + b_in_ref[...]   # (Bp, 3*Hdp)

        # ---- single-step GRU (PyTorch gate order r, z, n); 128-aligned lane slices ----
        r = jax.nn.sigmoid(gi[:, :Hdp] + hh[:, Hdp:2 * Hdp])
        z = jax.nn.sigmoid(gi[:, Hdp:2 * Hdp] + hh[:, 2 * Hdp:3 * Hdp])
        n = jnp.tanh(gi[:, 2 * Hdp:] + r * hh[:, 3 * Hdp:])
        h_new = (1.0 - z) * n + z * hidden                         # (Bp, Hdp) f32
        # dropout: eval mode -> identity; (output == hidden) holds for a 1-step GRU.
        # Padded batch rows / feature cols stay finite & zero-padded, so feeding the padded
        # state back across the decode loop is safe (they never touch valid rows).

        hid_out_ref[...] = h_new
        feats_ref[:, :Hdp] = h_new

    # ---- vocab-tiled fc_out: weight tile streamed (bf16 by default), f32 accumulate ----
    pred_ref[...] = (jnp.dot(feats_ref[...].astype(fcw_ref.dtype), fcw_ref[...],
                             preferred_element_type=jnp.float32) + fcb_ref[...])


# -----------------------------------------------------------------------------
# Host-side parameter construction / preparation (done once per model).
# -----------------------------------------------------------------------------
def make_params(key, V, E, He, Hd):
    """Logical (PyTorch-like, pre-transposed) parameters."""
    He2 = 2 * He
    ks = jax.random.split(key, 12)
    f = lambda k, shp: (0.1 * jax.random.normal(k, shp)).astype(jnp.float32)
    return {
        "emb": f(ks[0], (V, E)),
        # attention Linear(Hd + 2He -> Hd), split by the cat order (hidden, enc); v: (Hd,)
        "attn_wh": f(ks[1], (Hd, Hd)),
        "attn_we": f(ks[2], (He2, Hd)),
        "attn_b": f(ks[3], (Hd,)),
        "attn_v": f(ks[4], (Hd,)),
        # GRU(E + 2He -> Hd); input row order [embedded; weighted], gate column order r|z|n
        "gru_wih": f(ks[5], (E + He2, 3 * Hd)),
        "gru_whh": f(ks[6], (Hd, 3 * Hd)),
        "gru_bih": f(ks[7], (3 * Hd,)),
        "gru_bhh": f(ks[8], (3 * Hd,)),
        # fc_out(Hd + 2He + E -> V); row order [output; weighted; embedded]
        "fc_w": f(ks[9], (Hd + He2 + E, V)),
        "fc_b": f(ks[10], (V,)),
    }


def prepare_params(p, fc_dtype=jnp.bfloat16, compute_dtype=jnp.float32):
    """Pad / fuse weights into the TPU kernel layout (once per model).

    fc_dtype:      streaming dtype of the (large, HBM-resident) fc_out weights — bf16 default.
    compute_dtype: dtype of the small VMEM-resident weights and enc/encproj (f32 default;
                   bf16 is an option on v7x to halve the resident-enc footprint).
    """
    V, E = p["emb"].shape
    He2, Hd = p["attn_we"].shape
    cdt = compute_dtype
    Ep, He2p, Hdp = _rup(E, 128), _rup(He2, 128), _rup(Hd, 128)
    Kp = Hdp + He2p + Ep
    tV = min(2048, _rup(V, 128))          # large lane-dense vocab tile (HBM-roofline, not
    Vp = _rup(V, tV)                      # step-overhead, bound; bf16 tile <= ~1.5 MB)

    wih, whh = p["gru_wih"], p["gru_whh"]
    bih, bhh = p["gru_bih"], p["gru_bhh"]
    gcol = lambda w, g: w[:, g * Hd:(g + 1) * Hd]

    # Fused hidden-side weight/bias: [attn_Wh | Whh_r | Whh_z | Whh_n]  -> (Hdp, 4*Hdp)
    w_hid = jnp.concatenate(
        [_pad_to(p["attn_wh"], (Hdp, Hdp))]
        + [_pad_to(gcol(whh, g), (Hdp, Hdp)) for g in range(3)], axis=1).astype(cdt)
    b_hid = jnp.concatenate(
        [_pad_to(p["attn_b"][None, :], (1, Hdp))]
        + [_pad_to(bhh[g * Hd:(g + 1) * Hd][None, :], (1, Hdp)) for g in range(3)], axis=1)

    # Fused input-side weight/bias, row order [weighted ; embedded] to match feats[:, Hdp:]
    w_in = jnp.concatenate(
        [jnp.concatenate([_pad_to(gcol(wih[E:], g), (He2p, Hdp)) for g in range(3)], axis=1),
         jnp.concatenate([_pad_to(gcol(wih[:E], g), (Ep, Hdp)) for g in range(3)], axis=1)],
        axis=0).astype(cdt)                                                  # (He2p+Ep, 3*Hdp)
    b_in = jnp.concatenate(
        [_pad_to(bih[g * Hd:(g + 1) * Hd][None, :], (1, Hdp)) for g in range(3)], axis=1)

    fcw = p["fc_w"]
    fc_w = jnp.concatenate(
        [_pad_to(fcw[:Hd], (Hdp, Vp)),
         _pad_to(fcw[Hd:Hd + He2], (He2p, Vp)),
         _pad_to(fcw[Hd + He2:], (Ep, Vp))], axis=0).astype(fc_dtype)        # (Kp, Vp)
    fc_b = _pad_to(p["fc_b"][None, :], (1, Vp))

    return {
        "cdt": cdt, "fc_dtype": fc_dtype, "V": V, "Hd": Hd,
        "Ep": Ep, "He2p": He2p, "Hdp": Hdp, "Kp": Kp, "Vp": Vp, "tV": tV,
        # table stays f32 so the per-row DMA gather needs no sub-word packing tricks
        "emb": _pad_to(p["emb"], (V, Ep)),
        "attn_we": p["attn_we"],                                             # used in precompute
        "attn_v": _pad_to(p["attn_v"][None, :], (1, Hdp)),
        "w_hid": w_hid, "b_hid": b_hid, "w_in": w_in, "b_in": b_in,
        "fc_w": fc_w, "fc_b": fc_b,
    }


def precompute_encoder(encoder_outputs, kp):
    """Hoisted out of the per-token step: layout transpose + encoder-side attention proj."""
    enc_b = jnp.transpose(encoder_outputs, (1, 0, 2)).astype(jnp.float32)    # (B,S,2He)
    encproj = jnp.einsum("bse,eh->bsh", enc_b, kp["attn_we"])                # (B,S,Hd)
    B, S, _ = enc_b.shape
    Bp, Sp = _rup(B, 8), _rup(S, 8)
    return {"S": S, "B": B,
            "enc": _pad_to(enc_b, (Bp, Sp, kp["He2p"])).astype(kp["cdt"]),
            "encproj": _pad_to(encproj, (Bp, Sp, kp["Hdp"])).astype(kp["cdt"])}


def pad_ids(ids, enc_pre):
    Bp = enc_pre["enc"].shape[0]
    return jnp.zeros((Bp,), jnp.int32).at[:ids.shape[0]].set(ids.astype(jnp.int32))


def pad_hidden(hidden, enc_pre, kp):
    Bp = enc_pre["enc"].shape[0]
    return _pad_to(hidden.astype(jnp.float32), (Bp, kp["Hdp"]))


# -----------------------------------------------------------------------------
# One decode step == Decoder.forward, in the padded kernel layout.
# Feed h_new_p straight back in across the decode loop; slice only at the very end.
# (In production, wrap the whole decode loop in jit / lax.scan.)
# -----------------------------------------------------------------------------
def decoder_step_padded(ids_p, hidden_p, enc_pre, kp):
    Bp, Sp = enc_pre["enc"].shape[0], enc_pre["enc"].shape[1]
    Hdp, He2p, Ep = kp["Hdp"], kp["He2p"], kp["Ep"]
    Kp, Vp, tV = kp["Kp"], kp["Vp"], kp["tV"]

    vmem_res = pl.BlockSpec(memory_space=pltpu.MemorySpace.VMEM)   # resident, single copy

    grid_spec = pltpu.PrefetchScalarGridSpec(
        num_scalar_prefetch=1,                         # token ids -> SMEM
        grid=(Vp // tV,),                              # vocab tiles
        in_specs=[
            vmem_res,                                  # hidden            (Bp, Hdp)
            pl.BlockSpec(memory_space=pl.ANY),         # embedding table stays in HBM
            vmem_res,                                  # enc               (Bp, Sp, He2p)
            vmem_res,                                  # encproj = enc@W_e (Bp, Sp, Hdp)
            vmem_res,                                  # attn v            (1, Hdp)
            vmem_res,                                  # fused hidden-side W (Hdp, 4*Hdp)
            vmem_res,                                  # fused hidden-side b (1, 4*Hdp)
            vmem_res,                                  # fused input-side W  (He2p+Ep, 3*Hdp)
            vmem_res,                                  # fused input-side b  (1, 3*Hdp)
            pl.BlockSpec((Kp, tV), lambda j, ids: (0, j)),   # fc weight tile (double-buffered)
            pl.BlockSpec((1, tV), lambda j, ids: (0, j)),    # fc bias tile
        ],
        out_specs=(pl.BlockSpec((Bp, tV), lambda j, ids: (0, j)),    # pred tile (lane-dense)
                   pl.BlockSpec((Bp, Hdp), lambda j, ids: (0, 0))),  # h_new (resident across j)
        scratch_shapes=[pltpu.VMEM((Bp, Ep), jnp.float32),           # gathered embedding rows
                        pltpu.SemaphoreType.DMA((Bp,)),
                        pltpu.VMEM((Bp, Kp), jnp.float32)],          # feats (concat-by-layout)
    )

    fc_bytes = jnp.dtype(kp["fc_w"].dtype).itemsize
    enc_bytes = jnp.dtype(enc_pre["enc"].dtype).itemsize
    cost = pl.CostEstimate(
        flops=(2 * Bp * Kp * Vp + 2 * Bp * Hdp * 4 * Hdp
               + 2 * Bp * (He2p + Ep) * 3 * Hdp + 4 * Bp * Sp * (Hdp + He2p)),
        transcendentals=Bp * Sp * (Hdp + 1) + 3 * Bp * Hdp,
        bytes_accessed=int(Kp * Vp * fc_bytes + (Bp * Vp + Vp) * 4
                           + Bp * Sp * (He2p + Hdp) * enc_bytes
                           + (Hdp * 4 * Hdp + (He2p + Ep) * 3 * Hdp) * 4))

    pred_p, h_new_p = pl.pallas_call(
        functools.partial(_decoder_step_kernel, s_real=enc_pre["S"]),
        out_shape=(jax.ShapeDtypeStruct((Bp, Vp), jnp.float32),
                   jax.ShapeDtypeStruct((Bp, Hdp), jnp.float32)),
        grid_spec=grid_spec,
        compiler_params=pltpu.CompilerParams(
            # vocab tiles depend on feats computed at j == 0 -> sequential axis.
            dimension_semantics=("arbitrary",),
            vmem_limit_bytes=48 << 20),                # fits v7x's 64 MiB physical VMEM
        cost_estimate=cost,
    )(ids_p, hidden_p, kp["emb"], enc_pre["enc"], enc_pre["encproj"],
      kp["attn_v"], kp["w_hid"], kp["b_hid"], kp["w_in"], kp["b_in"],
      kp["fc_w"], kp["fc_b"])
    return pred_p, h_new_p


def decoder_step(ids, hidden, enc_pre, kp):
    """Convenience wrapper (pads inputs, slices outputs) for single-step use."""
    pred_p, h_new_p = decoder_step_padded(pad_ids(ids, enc_pre),
                                          pad_hidden(hidden, enc_pre, kp), enc_pre, kp)
    B = ids.shape[0]
    return pred_p[:B, :kp["V"]], h_new_p[:B, :kp["Hd"]]


# -----------------------------------------------------------------------------
# Pure-JAX reference of the same math.
# -----------------------------------------------------------------------------
def _reference_forward(ids, hidden, encoder_outputs, p):
    enc = jnp.transpose(encoder_outputs, (1, 0, 2))               # (B,S,2He)
    embedded = p["emb"][ids]                                      # (B,E)
    ha = hidden @ p["attn_wh"] + p["attn_b"]
    energy = jnp.tanh(jnp.einsum("bse,eh->bsh", enc, p["attn_we"]) + ha[:, None, :])
    scores = jnp.einsum("bsh,h->bs", energy, p["attn_v"])
    a = jax.nn.softmax(scores, axis=-1)
    weighted = jnp.einsum("bs,bse->be", a, enc)
    Hd = hidden.shape[1]
    gi = jnp.concatenate([embedded, weighted], axis=1) @ p["gru_wih"] + p["gru_bih"]
    gh = hidden @ p["gru_whh"] + p["gru_bhh"]
    r = jax.nn.sigmoid(gi[:, :Hd] + gh[:, :Hd])
    z = jax.nn.sigmoid(gi[:, Hd:2 * Hd] + gh[:, Hd:2 * Hd])
    n = jnp.tanh(gi[:, 2 * Hd:] + r * gh[:, 2 * Hd:])
    h_new = (1.0 - z) * n + z * hidden
    pred = jnp.concatenate([h_new, weighted, embedded], axis=1) @ p["fc_w"] + p["fc_b"]
    return pred, h_new


if __name__ == "__main__":
    # Small shapes consistent with the module.
    V, E, He, Hd, S, B = 16, 32, 32, 32, 8, 4

    key = jax.random.PRNGKey(0)
    kparam, k1, k2, k3, k4 = jax.random.split(key, 5)
    params = make_params(kparam, V, E, He, Hd)

    ids0 = jax.random.randint(k1, (B,), 0, V, dtype=jnp.int32)            # PyTorch `input`
    ids1 = jax.random.randint(k4, (B,), 0, V, dtype=jnp.int32)            # next-step tokens
    hidden0 = jax.random.normal(k2, (B, Hd), dtype=jnp.float32)
    encoder_outputs = jax.random.normal(k3, (S, B, 2 * He), dtype=jnp.float32)

    # Pure-JAX reference, two decode steps.
    ref_p0, ref_h1 = _reference_forward(ids0, hidden0, encoder_outputs, params)
    ref_p1, ref_h2 = _reference_forward(ids1, ref_h1, encoder_outputs, params)

    # ---- default path: bf16-streamed fc_out weights, f32 everywhere else ----
    kp = prepare_params(params)                        # fc_dtype = bf16
    enc_pre = precompute_encoder(encoder_outputs, kp)
    ids0_p = pad_ids(ids0, enc_pre)
    ids1_p = pad_ids(ids1, enc_pre)
    h0_p = pad_hidden(hidden0, enc_pre, kp)

    pred0_p, h1_p = decoder_step_padded(ids0_p, h0_p, enc_pre, kp)
    pred1_p, h2_p = decoder_step_padded(ids1_p, h1_p, enc_pre, kp)   # padded state fed back
    jax.block_until_ready((pred0_p, pred1_p, h1_p, h2_p))

    assert pred0_p.shape == (enc_pre["enc"].shape[0], kp["Vp"])
    assert jnp.allclose(pred0_p[:B, :V], ref_p0, atol=3e-2, rtol=3e-2)
    assert jnp.allclose(h1_p[:B, :Hd], ref_h1, atol=1e-2, rtol=1e-2)
    assert jnp.allclose(pred1_p[:B, :V], ref_p1, atol=3e-2, rtol=3e-2)
    assert jnp.allclose(h2_p[:B, :Hd], ref_h2, atol=1e-2, rtol=1e-2)

    # ---- exact path: f32 fc_out weights (tighter tolerance) ----
    kp32 = prepare_params(params, fc_dtype=jnp.float32)
    enc_pre32 = precompute_encoder(encoder_outputs, kp32)
    pred32, h32 = decoder_step(ids0, hidden0, enc_pre32, kp32)
    jax.block_until_ready((pred32, h32))
    assert pred32.shape == (B, V) and h32.shape == (B, Hd)
    assert jnp.allclose(pred32, ref_p0, atol=1e-2, rtol=1e-2)
    assert jnp.allclose(h32, ref_h1, atol=1e-2, rtol=1e-2)

    print("KERNEL_OK")
</pallas_src>

<mosaic_0001>
module attributes {stable_mosaic.version = 11 : i64} {
  func.func @_decoder_step_kernel(%arg0: i32, %arg1: memref<8xi32, #tpu.memory_space<smem>>, %arg2: memref<8x128xf32, #tpu.memory_space<vmem>>, %arg3: memref<16x128xf32, #tpu.memory_space<any>>, %arg4: memref<8x8x128xf32, #tpu.memory_space<vmem>>, %arg5: memref<8x8x128xf32, #tpu.memory_space<vmem>>, %arg6: memref<1x128xf32, #tpu.memory_space<vmem>>, %arg7: memref<128x512xf32, #tpu.memory_space<vmem>>, %arg8: memref<1x512xf32, #tpu.memory_space<vmem>>, %arg9: memref<256x384xf32, #tpu.memory_space<vmem>>, %arg10: memref<1x384xf32, #tpu.memory_space<vmem>>, %arg11: memref<384x128xbf16, #tpu.memory_space<vmem>>, %arg12: memref<1x128xf32, #tpu.memory_space<vmem>>, %arg13: memref<8x128xf32, #tpu.memory_space<vmem>>, %arg14: memref<8x128xf32, #tpu.memory_space<vmem>>, %arg15: memref<8x128xf32, #tpu.memory_space<vmem>>, %arg16: memref<8x!tpu.dma_semaphore, #tpu.memory_space<semaphore_mem>>, %arg17: memref<8x384xf32, #tpu.memory_space<vmem>>) attributes {dimension_semantics = [#tpu.dimension_semantics<arbitrary>], iteration_bounds = array<i64: 1>, scalar_prefetch = 1 : i64, scratch_operands = 3 : i64, tpu.core_type = #tpu.core_type<tc>, window_params = [{pipeline_mode = #tpu.pipeline_mode<synchronous>, transform_indices = @transform_0, window_bounds = array<i64: 8, 128>}, {}, {pipeline_mode = #tpu.pipeline_mode<synchronous>, transform_indices = @transform_2, window_bounds = array<i64: 8, 8, 128>}, {pipeline_mode = #tpu.pipeline_mode<synchronous>, transform_indices = @transform_3, window_bounds = array<i64: 8, 8, 128>}, {pipeline_mode = #tpu.pipeline_mode<synchronous>, transform_indices = @transform_4, window_bounds = array<i64: 1, 128>}, {pipeline_mode = #tpu.pipeline_mode<synchronous>, transform_indices = @transform_5, window_bounds = array<i64: 128, 512>}, {pipeline_mode = #tpu.pipeline_mode<synchronous>, transform_indices = @transform_6, window_bounds = array<i64: 1, 512>}, {pipeline_mode = #tpu.pipeline_mode<synchronous>, transform_indices = @transform_7, window_bounds = array<i64: 256, 384>}, {pipeline_mode = #tpu.pipeline_mode<synchronous>, transform_indices = @transform_8, window_bounds = array<i64: 1, 384>}, {transform_indices = @transform_9, window_bounds = array<i64: 384, 128>}, {transform_indices = @transform_10, window_bounds = array<i64: 1, 128>}, {transform_indices = @transform_11, window_bounds = array<i64: 8, 128>}, {pipeline_mode = #tpu.pipeline_mode<synchronous>, transform_indices = @transform_12, window_bounds = array<i64: 8, 128>}]} {
    %c0_i32 = arith.constant 0 : i32
    %0 = arith.cmpi eq, %arg0, %c0_i32 : i32
    %1 = arith.extui %0 : i1 to i32
    %c0_i32_0 = arith.constant 0 : i32
    %2 = arith.cmpi ne, %1, %c0_i32_0 : i32
    scf.if %2 {
      %c0_8 = arith.constant 0 : index
      %11 = memref.load %arg1[%c0_8] : memref<8xi32, #tpu.memory_space<smem>>
      %c1 = arith.constant 1 : index
      %12 = memref.load %arg1[%c1] : memref<8xi32, #tpu.memory_space<smem>>
      %c2 = arith.constant 2 : index
      %13 = memref.load %arg1[%c2] : memref<8xi32, #tpu.memory_space<smem>>
      %c3 = arith.constant 3 : index
      %14 = memref.load %arg1[%c3] : memref<8xi32, #tpu.memory_space<smem>>
      %c4 = arith.constant 4 : index
      %15 = memref.load %arg1[%c4] : memref<8xi32, #tpu.memory_space<smem>>
      %c5 = arith.constant 5 : index
      %16 = memref.load %arg1[%c5] : memref<8xi32, #tpu.memory_space<smem>>
      %c6 = arith.constant 6 : index
      %17 = memref.load %arg1[%c6] : memref<8xi32, #tpu.memory_space<smem>>
      %c7 = arith.constant 7 : index
      %18 = memref.load %arg1[%c7] : memref<8xi32, #tpu.memory_space<smem>>
      %c0_i32_9 = arith.constant 0 : i32
      %c0_i32_10 = arith.constant 0 : i32
      %19 = tpu.memref_slice %arg3[%11, %c0_i32_10] : memref<16x128xf32, #tpu.memory_space<any>> -> memref<1x128xf32, #tpu.memory_space<any>>
      %c0_i32_11 = arith.constant 0 : i32
      %c0_i32_12 = arith.constant 0 : i32
      %20 = tpu.memref_slice %arg15[%c0_i32_11, %c0_i32_12] : memref<8x128xf32, #tpu.memory_space<vmem>> -> memref<1x128xf32, #tpu.memory_space<vmem>>
      %21 = tpu.memref_slice %arg16[%c0_i32_9] : memref<8x!tpu.dma_semaphore, #tpu.memory_space<semaphore_mem>> -> memref<1x!tpu.dma_semaphore, #tpu.memory_space<semaphore_mem>>
      %22 = tpu.memref_squeeze %21 : memref<1x!tpu.dma_semaphore, #tpu.memory_space<semaphore_mem>> -> memref<!tpu.dma_semaphore, #tpu.memory_space<semaphore_mem>>
      tpu.enqueue_dma source(%19 : memref<1x128xf32, #tpu.memory_space<any>>) target(%20 : memref<1x128xf32, #tpu.memory_space<vmem>>) target_semaphore(%22 : memref<!tpu.dma_semaphore, #tpu.memory_space<semaphore_mem>>)
      %c1_i32 = arith.constant 1 : i32
      %c0_i32_13 = arith.constant 0 : i32
      %23 = tpu.memref_slice %arg3[%12, %c0_i32_13] : memref<16x128xf32, #tpu.memory_space<any>> -> memref<1x128xf32, #tpu.memory_space<any>>
      %c1_i32_14 = arith.constant 1 : i32
      %c0_i32_15 = arith.constant 0 : i32
      %24 = tpu.memref_slice %arg15[%c1_i32_14, %c0_i32_15] : memref<8x128xf32, #tpu.memory_space<vmem>> -> memref<1x128xf32, #tpu.memory_space<vmem>>
      %25 = tpu.memref_slice %arg16[%c1_i32] : memref<8x!tpu.dma_semaphore, #tpu.memory_space<semaphore_mem>> -> memref<1x!tpu.dma_semaphore, #tpu.memory_space<semaphore_mem>>
      %26 = tpu.memref_squeeze %25 : memref<1x!tpu.dma_semaphore, #tpu.memory_space<semaphore_mem>> -> memref<!tpu.dma_semaphore, #tpu.memory_space<semaphore_mem>>
      tpu.enqueue_dma source(%23 : memref<1x128xf32, #tpu.memory_space<any>>) target(%24 : memref<1x128xf32, #tpu.memory_space<vmem>>) target_semaphore(%26 : memref<!tpu.dma_semaphore, #tpu.memory_space<semaphore_mem>>)
      %c2_i32 = arith.constant 2 : i32
      %c0_i32_16 = arith.constant 0 : i32
      %27 = tpu.memref_slice %arg3[%13, %c0_i32_16] : memref<16x128xf32, #tpu.memory_space<any>> -> memref<1x128xf32, #tpu.memory_space<any>>
      %c2_i32_17 = arith.constant 2 : i32
      %c0_i32_18 = arith.constant 0 : i32
      %28 = tpu.memref_slice %arg15[%c2_i32_17, %c0_i32_18] : memref<8x128xf32, #tpu.memory_space<vmem>> -> memref<1x128xf32, #tpu.memory_space<vmem>>
      %29 = tpu.memref_slice %arg16[%c2_i32] : memref<8x!tpu.dma_semaphore, #tpu.memory_space<semaphore_mem>> -> memref<1x!tpu.dma_semaphore, #tpu.memory_space<semaphore_mem>>
      %30 = tpu.memref_squeeze %29 : memref<1x!tpu.dma_semaphore, #tpu.memory_space<semaphore_mem>> -> memref<!tpu.dma_semaphore, #tpu.memory_space<semaphore_mem>>
      tpu.enqueue_dma source(%27 : memref<1x128xf32, #tpu.memory_space<any>>) target(%28 : memref<1x128xf32, #tpu.memory_space<vmem>>) target_semaphore(%30 : memref<!tpu.dma_semaphore, #tpu.memory_space<semaphore_mem>>)
      %c3_i32 = arith.constant 3 : i32
      %c0_i32_19 = arith.constant 0 : i32
      %31 = tpu.memref_slice %arg3[%14, %c0_i32_19] : memref<16x128xf32, #tpu.memory_space<any>> -> memref<1x128xf32, #tpu.memory_space<any>>
      %c3_i32_20 = arith.constant 3 : i32
      %c0_i32_21 = arith.constant 0 : i32
      %32 = tpu.memref_slice %arg15[%c3_i32_20, %c0_i32_21] : memref<8x128xf32, #tpu.memory_space<vmem>> -> memref<1x128xf32, #tpu.memory_space<vmem>>
      %33 = tpu.memref_slice %arg16[%c3_i32] : memref<8x!tpu.dma_semaphore, #tpu.memory_space<semaphore_mem>> -> memref<1x!tpu.dma_semaphore, #tpu.memory_space<semaphore_mem>>
      %34 = tpu.memref_squeeze %33 : memref<1x!tpu.dma_semaphore, #tpu.memory_space<semaphore_mem>> -> memref<!tpu.dma_semaphore, #tpu.memory_space<semaphore_mem>>
      tpu.enqueue_dma source(%31 : memref<1x128xf32, #tpu.memory_space<any>>) target(%32 : memref<1x128xf32, #tpu.memory_space<vmem>>) target_semaphore(%34 : memref<!tpu.dma_semaphore, #tpu.memory_space<semaphore_mem>>)
      %c4_i32 = arith.constant 4 : i32
      %c0_i32_22 = arith.constant 0 : i32
      %35 = tpu.memref_slice %arg3[%15, %c0_i32_22] : memref<16x128xf32, #tpu.memory_space<any>> -> memref<1x128xf32, #tpu.memory_space<any>>
      %c4_i32_23 = arith.constant 4 : i32
      %c0_i32_24 = arith.constant 0 : i32
      %36 = tpu.memref_slice %arg15[%c4_i32_23, %c0_i32_24] : memref<8x128xf32, #tpu.memory_space<vmem>> -> memref<1x128xf32, #tpu.memory_space<vmem>>
      %37 = tpu.memref_slice %arg16[%c4_i32] : memref<8x!tpu.dma_semaphore, #tpu.memory_space<semaphore_mem>> -> memref<1x!tpu.dma_semaphore, #tpu.memory_space<semaphore_mem>>
      %38 = tpu.memref_squeeze %37 : memref<1x!tpu.dma_semaphore, #tpu.memory_space<semaphore_mem>> -> memref<!tpu.dma_semaphore, #tpu.memory_space<semaphore_mem>>
      tpu.enqueue_dma source(%35 : memref<1x128xf32, #tpu.memory_space<any>>) target(%36 : memref<1x128xf32, #tpu.memory_space<vmem>>) target_semaphore(%38 : memref<!tpu.dma_semaphore, #tpu.memory_space<semaphore_mem>>)
      %c5_i32 = arith.constant 5 : i32
      %c0_i32_25 = arith.constant 0 : i32
      %39 = tpu.memref_slice %arg3[%16, %c0_i32_25] : memref<16x128xf32, #tpu.memory_space<any>> -> memref<1x128xf32, #tpu.memory_space<any>>
      %c5_i32_26 = arith.constant 5 : i32
      %c0_i32_27 = arith.constant 0 : i32
      %40 = tpu.memref_slice %arg15[%c5_i32_26, %c0_i32_27] : memref<8x128xf32, #tpu.memory_space<vmem>> -> memref<1x128xf32, #tpu.memory_space<vmem>>
      %41 = tpu.memref_slice %arg16[%c5_i32] : memref<8x!tpu.dma_semaphore, #tpu.memory_space<semaphore_mem>> -> memref<1x!tpu.dma_semaphore, #tpu.memory_space<semaphore_mem>>
      %42 = tpu.memref_squeeze %41 : memref<1x!tpu.dma_semaphore, #tpu.memory_space<semaphore_mem>> -> memref<!tpu.dma_semaphore, #tpu.memory_space<semaphore_mem>>
      tpu.enqueue_dma source(%39 : memref<1x128xf32, #tpu.memory_space<any>>) target(%40 : memref<1x128xf32, #tpu.memory_space<vmem>>) target_semaphore(%42 : memref<!tpu.dma_semaphore, #tpu.memory_space<semaphore_mem>>)
      %c6_i32 = arith.constant 6 : i32
      %c0_i32_28 = arith.constant 0 : i32
      %43 = tpu.memref_slice %arg3[%17, %c0_i32_28] : memref<16x128xf32, #tpu.memory_space<any>> -> memref<1x128xf32, #tpu.memory_space<any>>
      %c6_i32_29 = arith.constant 6 : i32
      %c0_i32_30 = arith.constant 0 : i32
      %44 = tpu.memref_slice %arg15[%c6_i32_29, %c0_i32_30] : memref<8x128xf32, #tpu.memory_space<vmem>> -> memref<1x128xf32, #tpu.memory_space<vmem>>
      %45 = tpu.memref_slice %arg16[%c6_i32] : memref<8x!tpu.dma_semaphore, #tpu.memory_space<semaphore_mem>> -> memref<1x!tpu.dma_semaphore, #tpu.memory_space<semaphore_mem>>
      %46 = tpu.memref_squeeze %45 : memref<1x!tpu.dma_semaphore, #tpu.memory_space<semaphore_mem>> -> memref<!tpu.dma_semaphore, #tpu.memory_space<semaphore_mem>>
      tpu.enqueue_dma source(%43 : memref<1x128xf32, #tpu.memory_space<any>>) target(%44 : memref<1x128xf32, #tpu.memory_space<vmem>>) target_semaphore(%46 : memref<!tpu.dma_semaphore, #tpu.memory_space<semaphore_mem>>)
      %c7_i32 = arith.constant 7 : i32
      %c0_i32_31 = arith.constant 0 : i32
      %47 = tpu.memref_slice %arg3[%18, %c0_i32_31] : memref<16x128xf32, #tpu.memory_space<any>> -> memref<1x128xf32, #tpu.memory_space<any>>
      %c7_i32_32 = arith.constant 7 : i32
      %c0_i32_33 = arith.constant 0 : i32
      %48 = tpu.memref_slice %arg15[%c7_i32_32, %c0_i32_33] : memref<8x128xf32, #tpu.memory_space<vmem>> -> memref<1x128xf32, #tpu.memory_space<vmem>>
      %49 = tpu.memref_slice %arg16[%c7_i32] : memref<8x!tpu.dma_semaphore, #tpu.memory_space<semaphore_mem>> -> memref<1x!tpu.dma_semaphore, #tpu.memory_space<semaphore_mem>>
      %50 = tpu.memref_squeeze %49 : memref<1x!tpu.dma_semaphore, #tpu.memory_space<semaphore_mem>> -> memref<!tpu.dma_semaphore, #tpu.memory_space<semaphore_mem>>
      tpu.enqueue_dma source(%47 : memref<1x128xf32, #tpu.memory_space<any>>) target(%48 : memref<1x128xf32, #tpu.memory_space<vmem>>) target_semaphore(%50 : memref<!tpu.dma_semaphore, #tpu.memory_space<semaphore_mem>>)
      %c0_34 = arith.constant 0 : index
      %c0_35 = arith.constant 0 : index
      %51 = vector.load %arg2[%c0_34, %c0_35] : memref<8x128xf32, #tpu.memory_space<vmem>>, vector<8x128xf32>
      %c0_36 = arith.constant 0 : index
      %c0_37 = arith.constant 0 : index
      %52 = vector.load %arg7[%c0_36, %c0_37] : memref<128x512xf32, #tpu.memory_space<vmem>>, vector<128x512xf32>
      %cst_38 = arith.constant dense<0.000000e+00> : vector<8x512xf32>
      %53 = tpu.matmul %51, %52, %cst_38 {dimension_numbers = #tpu.dot_dimension_numbers<[1], [0], [0], [1], [0, 0, 1, 1], [], []>} : vector<8x128xf32>, vector<128x512xf32>, vector<8x512xf32> -> vector<8x512xf32>
      %c0_39 = arith.constant 0 : index
      %c0_40 = arith.constant 0 : index
      %54 = vector.load %arg8[%c0_39, %c0_40] : memref<1x512xf32, #tpu.memory_space<vmem>>, vector<1x512xf32>
      %55 = vector.broadcast %54 : vector<1x512xf32> to vector<8x512xf32>
      %56 = arith.addf %53, %55 : vector<8x512xf32>
      %57 = vector.extract_strided_slice %56 {offsets = [0, 0], sizes = [8, 128], strides = [1, 1]} : vector<8x512xf32> to vector<8x128xf32>
      %c0_41 = arith.constant 0 : index
      %c0_42 = arith.constant 0 : index
      %c0_43 = arith.constant 0 : index
      %58 = vector.load %arg5[%c0_41, %c0_42, %c0_43] : memref<8x8x128xf32, #tpu.memory_space<vmem>>, vector<8x8x128xf32>
      %59 = vector.shape_cast %57 : vector<8x128xf32> to vector<8x1x128xf32>
      %60 = vector.broadcast %59 : vector<8x1x128xf32> to vector<8x8x128xf32>
      %61 = arith.addf %58, %60 : vector<8x8x128xf32>
      %62 = math.tanh %61 : vector<8x8x128xf32>
      %c0_44 = arith.constant 0 : index
      %c0_45 = arith.constant 0 : index
      %63 = vector.load %arg6[%c0_44, %c0_45] : memref<1x128xf32, #tpu.memory_space<vmem>>, vector<1x128xf32>
      %64 = vector.shape_cast %63 : vector<1x128xf32> to vector<1x1x128xf32>
      %65 = vector.broadcast %64 : vector<1x1x128xf32> to vector<8x8x128xf32>
      %66 = arith.mulf %62, %65 : vector<8x8x128xf32>
      %cst_46 = arith.constant dense<0.000000e+00> : vector<8x8xf32>
      %67 = vector.multi_reduction <add>, %66, %cst_46 [2] : vector<8x8x128xf32> to vector<8x8xf32>
      %cst_47 = arith.constant dense<0xFF800000> : vector<8xf32>
      %68 = vector.multi_reduction <maximumf>, %67, %cst_47 [1] : vector<8x8xf32> to vector<8xf32>
      %69 = vector.shape_cast %68 : vector<8xf32> to vector<8x1xf32>
      %70 = vector.broadcast %69 : vector<8x1xf32> to vector<8x8xf32>
      %71 = arith.subf %67, %70 : vector<8x8xf32>
      %72 = math.exp %71 : vector<8x8xf32>
      %cst_48 = arith.constant dense<0.000000e+00> : vector<8xf32>
      %73 = vector.multi_reduction <add>, %72, %cst_48 [1] : vector<8x8xf32> to vector<8xf32>
      %74 = vector.shape_cast %73 : vector<8xf32> to vector<8x1xf32>
      %75 = vector.broadcast %74 : vector<8x1xf32> to vector<8x8xf32>
      %76 = arith.divf %72, %75 : vector<8x8xf32>
      %77 = vector.shape_cast %76 : vector<8x8xf32> to vector<8x8x1xf32>
      %c0_49 = arith.constant 0 : index
      %c0_50 = arith.constant 0 : index
      %c0_51 = arith.constant 0 : index
      %78 = vector.load %arg4[%c0_49, %c0_50, %c0_51] : memref<8x8x128xf32, #tpu.memory_space<vmem>>, vector<8x8x128xf32>
      %79 = vector.broadcast %77 : vector<8x8x1xf32> to vector<8x8x128xf32>
      %80 = arith.mulf %79, %78 : vector<8x8x128xf32>
      %cst_52 = arith.constant dense<0.000000e+00> : vector<8x128xf32>
      %81 = vector.multi_reduction <add>, %80, %cst_52 [1] : vector<8x8x128xf32> to vector<8x128xf32>
      %c0_i32_53 = arith.constant 0 : i32
      %c0_i32_54 = arith.constant 0 : i32
      %82 = tpu.memref_slice %arg3[%11, %c0_i32_54] : memref<16x128xf32, #tpu.memory_space<any>> -> memref<1x128xf32, #tpu.memory_space<any>>
      %c0_i32_55 = arith.constant 0 : i32
      %c0_i32_56 = arith.constant 0 : i32
      %83 = tpu.memref_slice %arg15[%c0_i32_55, %c0_i32_56] : memref<8x128xf32, #tpu.memory_space<vmem>> -> memref<1x128xf32, #tpu.memory_space<vmem>>
      %84 = tpu.memref_slice %arg16[%c0_i32_53] : memref<8x!tpu.dma_semaphore, #tpu.memory_space<semaphore_mem>> -> memref<1x!tpu.dma_semaphore, #tpu.memory_space<semaphore_mem>>
      %85 = tpu.memref_squeeze %84 : memref<1x!tpu.dma_semaphore, #tpu.memory_space<semaphore_mem>> -> memref<!tpu.dma_semaphore, #tpu.memory_space<semaphore_mem>>
      tpu.wait_dma2 semaphore(%85 : memref<!tpu.dma_semaphore, #tpu.memory_space<semaphore_mem>>) src(%82 : memref<1x128xf32, #tpu.memory_space<any>>) dst(%83 : memref<1x128xf32, #tpu.memory_space<vmem>>)
      %c1_i32_57 = arith.constant 1 : i32
      %c0_i32_58 = arith.constant 0 : i32
      %86 = tpu.memref_slice %arg3[%12, %c0_i32_58] : memref<16x128xf32, #tpu.memory_space<any>> -> memref<1x128xf32, #tpu.memory_space<any>>
      %c1_i32_59 = arith.constant 1 : i32
      %c0_i32_60 = arith.constant 0 : i32
      %87 = tpu.memref_slice %arg15[%c1_i32_59, %c0_i32_60] : memref<8x128xf32, #tpu.memory_space<vmem>> -> memref<1x128xf32, #tpu.memory_space<vmem>>
      %88 = tpu.memref_slice %arg16[%c1_i32_57] : memref<8x!tpu.dma_semaphore, #tpu.memory_space<semaphore_mem>> -> memref<1x!tpu.dma_semaphore, #tpu.memory_space<semaphore_mem>>
      %89 = tpu.memref_squeeze %88 : memref<1x!tpu.dma_semaphore, #tpu.memory_space<semaphore_mem>> -> memref<!tpu.dma_semaphore, #tpu.memory_space<semaphore_mem>>
      tpu.wait_dma2 semaphore(%89 : memref<!tpu.dma_semaphore, #tpu.memory_space<semaphore_mem>>) src(%86 : memref<1x128xf32, #tpu.memory_space<any>>) dst(%87 : memref<1x128xf32, #tpu.memory_space<vmem>>)
      %c2_i32_61 = arith.constant 2 : i32
      %c0_i32_62 = arith.constant 0 : i32
      %90 = tpu.memref_slice %arg3[%13, %c0_i32_62] : memref<16x128xf32, #tpu.memory_space<any>> -> memref<1x128xf32, #tpu.memory_space<any>>
      %c2_i32_63 = arith.constant 2 : i32
      %c0_i32_64 = arith.constant 0 : i32
      %91 = tpu.memref_slice %arg15[%c2_i32_63, %c0_i32_64] : memref<8x128xf32, #tpu.memory_space<vmem>> -> memref<1x128xf32, #tpu.memory_space<vmem>>
      %92 = tpu.memref_slice %arg16[%c2_i32_61] : memref<8x!tpu.dma_semaphore, #tpu.memory_space<semaphore_mem>> -> memref<1x!tpu.dma_semaphore, #tpu.memory_space<semaphore_mem>>
      %93 = tpu.memref_squeeze %92 : memref<1x!tpu.dma_semaphore, #tpu.memory_space<semaphore_mem>> -> memref<!tpu.dma_semaphore, #tpu.memory_space<semaphore_mem>>
      tpu.wait_dma2 semaphore(%93 : memref<!tpu.dma_semaphore, #tpu.memory_space<semaphore_mem>>) src(%90 : memref<1x128xf32, #tpu.memory_space<any>>) dst(%91 : memref<1x128xf32, #tpu.memory_space<vmem>>)
      %c3_i32_65 = arith.constant 3 : i32
      %c0_i32_66 = arith.constant 0 : i32
      %94 = tpu.memref_slice %arg3[%14, %c0_i32_66] : memref<16x128xf32, #tpu.memory_space<any>> -> memref<1x128xf32, #tpu.memory_space<any>>
      %c3_i32_67 = arith.constant 3 : i32
      %c0_i32_68 = arith.constant 0 : i32
      %95 = tpu.memref_slice %arg15[%c3_i32_67, %c0_i32_68] : memref<8x128xf32, #tpu.memory_space<vmem>> -> memref<1x128xf32, #tpu.memory_space<vmem>>
      %96 = tpu.memref_slice %arg16[%c3_i32_65] : memref<8x!tpu.dma_semaphore, #tpu.memory_space<semaphore_mem>> -> memref<1x!tpu.dma_semaphore, #tpu.memory_space<semaphore_mem>>
      %97 = tpu.memref_squeeze %96 : memref<1x!tpu.dma_semaphore, #tpu.memory_space<semaphore_mem>> -> memref<!tpu.dma_semaphore, #tpu.memory_space<semaphore_mem>>
      tpu.wait_dma2 semaphore(%97 : memref<!tpu.dma_semaphore, #tpu.memory_space<semaphore_mem>>) src(%94 : memref<1x128xf32, #tpu.memory_space<any>>) dst(%95 : memref<1x128xf32, #tpu.memory_space<vmem>>)
      %c4_i32_69 = arith.constant 4 : i32
      %c0_i32_70 = arith.constant 0 : i32
      %98 = tpu.memref_slice %arg3[%15, %c0_i32_70] : memref<16x128xf32, #tpu.memory_space<any>> -> memref<1x128xf32, #tpu.memory_space<any>>
      %c4_i32_71 = arith.constant 4 : i32
      %c0_i32_72 = arith.constant 0 : i32
      %99 = tpu.memref_slice %arg15[%c4_i32_71, %c0_i32_72] : memref<8x128xf32, #tpu.memory_space<vmem>> -> memref<1x128xf32, #tpu.memory_space<vmem>>
      %100 = tpu.memref_slice %arg16[%c4_i32_69] : memref<8x!tpu.dma_semaphore, #tpu.memory_space<semaphore_mem>> -> memref<1x!tpu.dma_semaphore, #tpu.memory_space<semaphore_mem>>
      %101 = tpu.memref_squeeze %100 : memref<1x!tpu.dma_semaphore, #tpu.memory_space<semaphore_mem>> -> memref<!tpu.dma_semaphore, #tpu.memory_space<semaphore_mem>>
      tpu.wait_dma2 semaphore(%101 : memref<!tpu.dma_semaphore, #tpu.memory_space<semaphore_mem>>) src(%98 : memref<1x128xf32, #tpu.memory_space<any>>) dst(%99 : memref<1x128xf32, #tpu.memory_space<vmem>>)
      %c5_i32_73 = arith.constant 5 : i32
      %c0_i32_74 = arith.constant 0 : i32
      %102 = tpu.memref_slice %arg3[%16, %c0_i32_74] : memref<16x128xf32, #tpu.memory_space<any>> -> memref<1x128xf32, #tpu.memory_space<any>>
      %c5_i32_75 = arith.constant 5 : i32
      %c0_i32_76 = arith.constant 0 : i32
      %103 = tpu.memref_slice %arg15[%c5_i32_75, %c0_i32_76] : memref<8x128xf32, #tpu.memory_space<vmem>> -> memref<1x128xf32, #tpu.memory_space<vmem>>
      %104 = tpu.memref_slice %arg16[%c5_i32_73] : memref<8x!tpu.dma_semaphore, #tpu.memory_space<semaphore_mem>> -> memref<1x!tpu.dma_semaphore, #tpu.memory_space<semaphore_mem>>
      %105 = tpu.memref_squeeze %104 : memref<1x!tpu.dma_semaphore, #tpu.memory_space<semaphore_mem>> -> memref<!tpu.dma_semaphore, #tpu.memory_space<semaphore_mem>>
      tpu.wait_dma2 semaphore(%105 : memref<!tpu.dma_semaphore, #tpu.memory_space<semaphore_mem>>) src(%102 : memref<1x128xf32, #tpu.memory_space<any>>) dst(%103 : memref<1x128xf32, #tpu.memory_space<vmem>>)
      %c6_i32_77 = arith.constant 6 : i32
      %c0_i32_78 = arith.constant 0 : i32
      %106 = tpu.memref_slice %arg3[%17, %c0_i32_78] : memref<16x128xf32, #tpu.memory_space<any>> -> memref<1x128xf32, #tpu.memory_space<any>>
      %c6_i32_79 = arith.constant 6 : i32
      %c0_i32_80 = arith.constant 0 : i32
      %107 = tpu.memref_slice %arg15[%c6_i32_79, %c0_i32_80] : memref<8x128xf32, #tpu.memory_space<vmem>> -> memref<1x128xf32, #tpu.memory_space<vmem>>
      %108 = tpu.memref_slice %arg16[%c6_i32_77] : memref<8x!tpu.dma_semaphore, #tpu.memory_space<semaphore_mem>> -> memref<1x!tpu.dma_semaphore, #tpu.memory_space<semaphore_mem>>
      %109 = tpu.memref_squeeze %108 : memref<1x!tpu.dma_semaphore, #tpu.memory_space<semaphore_mem>> -> memref<!tpu.dma_semaphore, #tpu.memory_space<semaphore_mem>>
      tpu.wait_dma2 semaphore(%109 : memref<!tpu.dma_semaphore, #tpu.memory_space<semaphore_mem>>) src(%106 : memref<1x128xf32, #tpu.memory_space<any>>) dst(%107 : memref<1x128xf32, #tpu.memory_space<vmem>>)
      %c7_i32_81 = arith.constant 7 : i32
      %c0_i32_82 = arith.constant 0 : i32
      %110 = tpu.memref_slice %arg3[%18, %c0_i32_82] : memref<16x128xf32, #tpu.memory_space<any>> -> memref<1x128xf32, #tpu.memory_space<any>>
      %c7_i32_83 = arith.constant 7 : i32
      %c0_i32_84 = arith.constant 0 : i32
      %111 = tpu.memref_slice %arg15[%c7_i32_83, %c0_i32_84] : memref<8x128xf32, #tpu.memory_space<vmem>> -> memref<1x128xf32, #tpu.memory_space<vmem>>
      %112 = tpu.memref_slice %arg16[%c7_i32_81] : memref<8x!tpu.dma_semaphore, #tpu.memory_space<semaphore_mem>> -> memref<1x!tpu.dma_semaphore, #tpu.memory_space<semaphore_mem>>
      %113 = tpu.memref_squeeze %112 : memref<1x!tpu.dma_semaphore, #tpu.memory_space<semaphore_mem>> -> memref<!tpu.dma_semaphore, #tpu.memory_space<semaphore_mem>>
      tpu.wait_dma2 semaphore(%113 : memref<!tpu.dma_semaphore, #tpu.memory_space<semaphore_mem>>) src(%110 : memref<1x128xf32, #tpu.memory_space<any>>) dst(%111 : memref<1x128xf32, #tpu.memory_space<vmem>>)
      %c0_85 = arith.constant 0 : index
      %c0_86 = arith.constant 0 : index
      %114 = vector.load %arg15[%c0_85, %c0_86] : memref<8x128xf32, #tpu.memory_space<vmem>>, vector<8x128xf32>
      %c0_87 = arith.constant 0 : index
      %c128 = arith.constant 128 : index
      %115 = vector.load %arg17[%c0_87, %c128] : memref<8x384xf32, #tpu.memory_space<vmem>>, vector<8x128xf32>
      tpu.vector_store %arg17[%c0_87, %c128], %81 {strides = array<i32>} : memref<8x384xf32, #tpu.memory_space<vmem>>, vector<8x128xf32>,
      %c0_88 = arith.constant 0 : index
      %c256 = arith.constant 256 : index
      %116 = vector.load %arg17[%c0_88, %c256] : memref<8x384xf32, #tpu.memory_space<vmem>>, vector<8x128xf32>
      tpu.vector_store %arg17[%c0_88, %c256], %114 {strides = array<i32>} : memref<8x384xf32, #tpu.memory_space<vmem>>, vector<8x128xf32>,
      %c0_89 = arith.constant 0 : index
      %c128_90 = arith.constant 128 : index
      %117 = vector.load %arg17[%c0_89, %c128_90] : memref<8x384xf32, #tpu.memory_space<vmem>>, vector<8x256xf32>
      %c0_91 = arith.constant 0 : index
      %c0_92 = arith.constant 0 : index
      %118 = vector.load %arg9[%c0_91, %c0_92] : memref<256x384xf32, #tpu.memory_space<vmem>>, vector<256x384xf32>
      %cst_93 = arith.constant dense<0.000000e+00> : vector<8x384xf32>
      %119 = tpu.matmul %117, %118, %cst_93 {dimension_numbers = #tpu.dot_dimension_numbers<[1], [0], [0], [1], [0, 0, 1, 1], [], []>} : vector<8x256xf32>, vector<256x384xf32>, vector<8x384xf32> -> vector<8x384xf32>
      %c0_94 = arith.constant 0 : index
      %c0_95 = arith.constant 0 : index
      %120 = vector.load %arg10[%c0_94, %c0_95] : memref<1x384xf32, #tpu.memory_space<vmem>>, vector<1x384xf32>
      %121 = vector.broadcast %120 : vector<1x384xf32> to vector<8x384xf32>
      %122 = arith.addf %119, %121 : vector<8x384xf32>
      %123 = vector.extract_strided_slice %122 {offsets = [0, 0], sizes = [8, 128], strides = [1, 1]} : vector<8x384xf32> to vector<8x128xf32>
      %124 = vector.extract_strided_slice %56 {offsets = [0, 128], sizes = [8, 128], strides = [1, 1]} : vector<8x512xf32> to vector<8x128xf32>
      %125 = arith.addf %123, %124 : vector<8x128xf32>
      %126 = arith.negf %125 : vector<8x128xf32>
      %127 = math.exp %126 : vector<8x128xf32>
      %cst_96 = arith.constant 1.000000e+00 : f32
      %128 = vector.broadcast %cst_96 : f32 to vector<8x128xf32>
      %129 = arith.addf %128, %127 : vector<8x128xf32>
      %130 = arith.divf %128, %129 : vector<8x128xf32>
      %131 = vector.extract_strided_slice %122 {offsets = [0, 128], sizes = [8, 128], strides = [1, 1]} : vector<8x384xf32> to vector<8x128xf32>
      %132 = vector.extract_strided_slice %56 {offsets = [0, 256], sizes = [8, 128], strides = [1, 1]} : vector<8x512xf32> to vector<8x128xf32>
      %133 = arith.addf %131, %132 : vector<8x128xf32>
      %134 = arith.negf %133 : vector<8x128xf32>
      %135 = math.exp %134 : vector<8x128xf32>
      %cst_97 = arith.constant 1.000000e+00 : f32
      %136 = vector.broadcast %cst_97 : f32 to vector<8x128xf32>
      %137 = arith.addf %136, %135 : vector<8x128xf32>
      %138 = arith.divf %136, %137 : vector<8x128xf32>
      %139 = vector.extract_strided_slice %122 {offsets = [0, 256], sizes = [8, 128], strides = [1, 1]} : vector<8x384xf32> to vector<8x128xf32>
      %140 = vector.extract_strided_slice %56 {offsets = [0, 384], sizes = [8, 128], strides = [1, 1]} : vector<8x512xf32> to vector<8x128xf32>
      %141 = arith.mulf %130, %140 : vector<8x128xf32>
      %142 = arith.addf %139, %141 : vector<8x128xf32>
      %143 = math.tanh %142 : vector<8x128xf32>
      %cst_98 = arith.constant 1.000000e+00 : f32
      %144 = vector.broadcast %cst_98 : f32 to vector<8x128xf32>
      %145 = arith.subf %144, %138 : vector<8x128xf32>
      %146 = arith.mulf %145, %143 : vector<8x128xf32>
      %147 = arith.mulf %138, %51 : vector<8x128xf32>
      %148 = arith.addf %146, %147 : vector<8x128xf32>
      %c0_99 = arith.constant 0 : index
      %c0_100 = arith.constant 0 : index
      %149 = vector.load %arg14[%c0_99, %c0_100] : memref<8x128xf32, #tpu.memory_space<vmem>>, vector<8x128xf32>
      tpu.vector_store %arg14[%c0_99, %c0_100], %148 {strides = array<i32>} : memref<8x128xf32, #tpu.memory_space<vmem>>, vector<8x128xf32>,
      %c0_101 = arith.constant 0 : index
      %c0_102 = arith.constant 0 : index
      %150 = vector.load %arg17[%c0_101, %c0_102] : memref<8x384xf32, #tpu.memory_space<vmem>>, vector<8x128xf32>
      tpu.vector_store %arg17[%c0_101, %c0_102], %148 {strides = array<i32>} : memref<8x384xf32, #tpu.memory_space<vmem>>, vector<8x128xf32>,
    } else {
    }
    %c0 = arith.constant 0 : index
    %c0_1 = arith.constant 0 : index
    %3 = vector.load %arg17[%c0, %c0_1] : memref<8x384xf32, #tpu.memory_space<vmem>>, vector<8x384xf32>
    %4 = arith.truncf %3 : vector<8x384xf32> to vector<8x384xbf16>
    %c0_2 = arith.constant 0 : index
    %c0_3 = arith.constant 0 : index
    %5 = vector.load %arg11[%c0_2, %c0_3] : memref<384x128xbf16, #tpu.memory_space<vmem>>, vector<384x128xbf16>
    %cst = arith.constant dense<0.000000e+00> : vector<8x128xf32>
    %6 = tpu.matmul %4, %5, %cst {dimension_numbers = #tpu.dot_dimension_numbers<[1], [0], [0], [1], [0, 0, 1, 1], [], []>} : vector<8x384xbf16>, vector<384x128xbf16>, vector<8x128xf32> -> vector<8x128xf32>
    %c0_4 = arith.constant 0 : index
    %c0_5 = arith.constant 0 : index
    %7 = vector.load %arg12[%c0_4, %c0_5] : memref<1x128xf32, #tpu.memory_space<vmem>>, vector<1x128xf32>
    %8 = vector.broadcast %7 : vector<1x128xf32> to vector<8x128xf32>
    %9 = arith.addf %6, %8 : vector<8x128xf32>
    %c0_6 = arith.constant 0 : index
    %c0_7 = arith.constant 0 : index
    %10 = vector.load %arg13[%c0_6, %c0_7] : memref<8x128xf32, #tpu.memory_space<vmem>>, vector<8x128xf32>
    tpu.vector_store %arg13[%c0_6, %c0_7], %9 {strides = array<i32>} : memref<8x128xf32, #tpu.memory_space<vmem>>, vector<8x128xf32>,
    return
  }
  func.func @transform_0(%arg0: i32, %arg1: memref<8xi32, #tpu.memory_space<smem>>) -> (i32, i32) {
    %c0_i32 = arith.constant 0 : i32
    %c0_i32_0 = arith.constant 0 : i32
    %c0_i32_1 = arith.constant 0 : i32
    return %c0_i32, %c0_i32_0 : i32, i32
  }
  func.func @transform_2(%arg0: i32, %arg1: memref<8xi32, #tpu.memory_space<smem>>) -> (i32, i32, i32) {
    %c0_i32 = arith.constant 0 : i32
    %c0_i32_0 = arith.constant 0 : i32
    %c0_i32_1 = arith.constant 0 : i32
    %c0_i32_2 = arith.constant 0 : i32
    return %c0_i32, %c0_i32_0, %c0_i32_1 : i32, i32, i32
  }
  func.func @transform_3(%arg0: i32, %arg1: memref<8xi32, #tpu.memory_space<smem>>) -> (i32, i32, i32) {
    %c0_i32 = arith.constant 0 : i32
    %c0_i32_0 = arith.constant 0 : i32
    %c0_i32_1 = arith.constant 0 : i32
    %c0_i32_2 = arith.constant 0 : i32
    return %c0_i32, %c0_i32_0, %c0_i32_1 : i32, i32, i32
  }
  func.func @transform_4(%arg0: i32, %arg1: memref<8xi32, #tpu.memory_space<smem>>) -> (i32, i32) {
    %c0_i32 = arith.constant 0 : i32
    %c0_i32_0 = arith.constant 0 : i32
    %c0_i32_1 = arith.constant 0 : i32
    return %c0_i32, %c0_i32_0 : i32, i32
  }
  func.func @transform_5(%arg0: i32, %arg1: memref<8xi32, #tpu.memory_space<smem>>) -> (i32, i32) {
    %c0_i32 = arith.constant 0 : i32
    %c0_i32_0 = arith.constant 0 : i32
    %c0_i32_1 = arith.constant 0 : i32
    return %c0_i32, %c0_i32_0 : i32, i32
  }
  func.func @transform_6(%arg0: i32, %arg1: memref<8xi32, #tpu.memory_space<smem>>) -> (i32, i32) {
    %c0_i32 = arith.constant 0 : i32
    %c0_i32_0 = arith.constant 0 : i32
    %c0_i32_1 = arith.constant 0 : i32
    return %c0_i32, %c0_i32_0 : i32, i32
  }
  func.func @transform_7(%arg0: i32, %arg1: memref<8xi32, #tpu.memory_space<smem>>) -> (i32, i32) {
    %c0_i32 = arith.constant 0 : i32
    %c0_i32_0 = arith.constant 0 : i32
    %c0_i32_1 = arith.constant 0 : i32
    return %c0_i32, %c0_i32_0 : i32, i32
  }
  func.func @transform_8(%arg0: i32, %arg1: memref<8xi32, #tpu.memory_space<smem>>) -> (i32, i32) {
    %c0_i32 = arith.constant 0 : i32
    %c0_i32_0 = arith.constant 0 : i32
    %c0_i32_1 = arith.constant 0 : i32
    return %c0_i32, %c0_i32_0 : i32, i32
  }
  func.func @transform_9(%arg0: i32, %arg1: memref<8xi32, #tpu.memory_space<smem>>) -> (i32, i32) {
    %c0_i32 = arith.constant 0 : i32
    %c0_i32_0 = arith.constant 0 : i32
    return %c0_i32, %arg0 : i32, i32
  }
  func.func @transform_10(%arg0: i32, %arg1: memref<8xi32, #tpu.memory_space<smem>>) -> (i32, i32) {
    %c0_i32 = arith.constant 0 : i32
    %c0_i32_0 = arith.constant 0 : i32
    return %c0_i32, %arg0 : i32, i32
  }
  func.func @transform_11(%arg0: i32, %arg1: memref<8xi32, #tpu.memory_space<smem>>) -> (i32, i32) {
    %c0_i32 = arith.constant 0 : i32
    %c0_i32_0 = arith.constant 0 : i32
    return %c0_i32, %arg0 : i32, i32
  }
  func.func @transform_12(%arg0: i32, %arg1: memref<8xi32, #tpu.memory_space<smem>>) -> (i32, i32) {
    %c0_i32 = arith.constant 0 : i32
    %c0_i32_0 = arith.constant 0 : i32
    %c0_i32_1 = arith.constant 0 : i32
    return %c0_i32, %c0_i32_0 : i32, i32
  }
}

</mosaic_0001>

<llo_original>
// kernel: tpu_custom_call.1
$region0: #{tpu_custom_call.1}
  #allocation0 [shape = 'u32[]', space=smem, size = 0x4, offset = 0x4, fixed_abs, tag = 'smem constant byte address 0x4 - core index']
  #allocation1 [shape = 'u32[144,128]{1,0:T(1,128)}', space=vmem, size = 0x12000, scoped, tag = 'internal scratch']
  #allocation2 [shape = 'f32[8,128]{1,0:T(8,128)}', space=vmem, size = 0x1000, scoped, tag = 'scratch operand']
  #allocation3 [shape = 's32[8]{0}', space=sflag, size = 0x20, scoped, tag = 'scratch operand']
  #allocation4 [shape = 'f32[8,384]{1,0:T(8,128)}', space=vmem, size = 0x3000, scoped, tag = 'scratch operand']
  #allocation5 [shape = 's32[1]{0}', space=sflag, size = 0x4, scoped, tag = 'scoped memory for tpu_custom_call.1']
  #allocation6 [shape = 'u8[512]{0}', space=smem, size = 0x200, scoped, tag = 'prefetched SMEM operand 0']
  #allocation21 [shape = 's32[]', space=sflag, size = 0x4, offset = 0, fixed_abs, tag = 'sflag constant byte address 0x0 - dummy sync flag']
  #allocation22 [shape = 's32[]', space=sflag, size = 0x4, offset = 0, fixed_abs, tag = 'sflag constant byte address 0x0 - dummy sync flag']
  #allocation23 [shape = 'u32[]', space=smem, size = 0x4, offset = 0x44, fixed_abs, tag = 'smem constant byte address 0x44 - assertion arg 0']
  #allocation24 [shape = 'u32[]', space=smem, size = 0x4, offset = 0x48, fixed_abs, tag = 'smem constant byte address 0x48 - assertion arg 1']
  #allocation25 [shape = 's32[]', space=sflag, size = 0x4, offset = 0, fixed_abs, tag = 'sflag constant byte address 0x0 - dummy sync flag']
  #allocation26 [shape = 's32[]', space=sflag, size = 0x4, offset = 0, fixed_abs, tag = 'sflag constant byte address 0x0 - dummy sync flag']
  #allocation27 [shape = 's32[]', space=sflag, size = 0x4, offset = 0, fixed_abs, tag = 'sflag constant byte address 0x0 - dummy sync flag']
  #allocation28 [shape = 's32[]', space=sflag, size = 0x4, offset = 0, fixed_abs, tag = 'sflag constant byte address 0x0 - dummy sync flag']
  #allocation29 [shape = 's32[]', space=sflag, size = 0x4, offset = 0, fixed_abs, tag = 'sflag constant byte address 0x0 - dummy sync flag']
  #allocation30 [shape = 's32[]', space=sflag, size = 0x4, offset = 0, fixed_abs, tag = 'sflag constant byte address 0x0 - dummy sync flag']
  #allocation31 [shape = 's32[]', space=sflag, size = 0x4, offset = 0, fixed_abs, tag = 'sflag constant byte address 0x0 - dummy sync flag']
  #allocation32 [shape = 's32[]', space=sflag, size = 0x4, offset = 0, fixed_abs, tag = 'sflag constant byte address 0x0 - dummy sync flag']
  #allocation33 [shape = 's32[]', space=sflag, size = 0x4, offset = 0, fixed_abs, tag = 'sflag constant byte address 0x0 - dummy sync flag']
  #allocation34 [shape = 's32[]', space=sflag, size = 0x4, offset = 0, fixed_abs, tag = 'sflag constant byte address 0x0 - dummy sync flag']
  #allocation35 [shape = 's32[]', space=sflag, size = 0x4, offset = 0, fixed_abs, tag = 'sflag constant byte address 0x0 - dummy sync flag']
  #allocation36 [shape = 's32[]', space=sflag, size = 0x4, offset = 0, fixed_abs, tag = 'sflag constant byte address 0x0 - dummy sync flag']
  #allocation37 [shape = 's32[]', space=sflag, size = 0x4, offset = 0, fixed_abs, tag = 'sflag constant byte address 0x0 - dummy sync flag']
  #allocation38 [shape = 's32[]', space=sflag, size = 0x4, offset = 0, fixed_abs, tag = 'sflag constant byte address 0x0 - dummy sync flag']
  %s0 = inlined_call_operand.hbm [shape: s32[8], index: 0, kind: input, shape index: {}]
  %s1 = inlined_call_operand.hbm [shape: f32[8,128], index: 1, kind: input, shape index: {}]
  %s2 = inlined_call_operand.hbm [shape: f32[16,128], index: 2, kind: input, shape index: {}]
  %s3 = inlined_call_operand.hbm [shape: f32[8,8,128], index: 3, kind: input, shape index: {}]
  %s4 = inlined_call_operand.hbm [shape: f32[8,8,128], index: 4, kind: input, shape index: {}]
  %s5 = inlined_call_operand.vmem [shape: f32[1,128], index: 5, kind: input, shape index: {}]
  %s6 = inlined_call_operand.hbm [shape: f32[128,512], index: 6, kind: input, shape index: {}]
  %s7 = inlined_call_operand.vmem [shape: f32[1,512], index: 7, kind: input, shape index: {}]
  %s8 = inlined_call_operand.hbm [shape: f32[256,384], index: 8, kind: input, shape index: {}]
  %s9 = inlined_call_operand.vmem [shape: f32[1,384], index: 9, kind: input, shape index: {}]
  %s10 = inlined_call_operand.hbm [shape: bf16[384,128], index: 10, kind: input, shape index: {}]
  %s11 = inlined_call_operand.vmem [shape: f32[1,128], index: 11, kind: input, shape index: {}]
  %s12 = inlined_call_operand.hbm [shape: f32[8,128], index: 12, kind: output, shape index: {0}]
  %s13 = inlined_call_operand.hbm [shape: f32[8,128], index: 13, kind: output, shape index: {1}]
  %14 = xla_tuple %s12, %s13
  %s15 = sld [smem:[#allocation0]]
  $region118: #{tpu_custom_call.1} parent=0
    _
  %s17 = ssub.s32 1, %s15
  %s18 = scalar_select 0, %s17, %s15
  %20 = dma.hbm_to_smem %s0, 16, [#allocation6], [#allocation5]
  %21 = dma.done [#allocation5], 16
  %22 = sfence
  $region1: #{tpu_custom_call.1} parent=0
    #allocation7 [shape = 'u8[4096]{0}', space=vmem, size = 0x1000, scoped, tag = 'input window, operand 1, single buffered']
    #allocation8 [shape = 's32[1]{0}', space=sflag, size = 0x4, scoped, tag = 'scoped memory for tpu_custom_call.1']
    #allocation9 [shape = 's32[1]{0}', space=sflag, size = 0x4, scoped, tag = 'scoped memory for tpu_custom_call.1']
    #allocation10 [shape = 'u8[32768]{0}', space=vmem, size = 0x8000, scoped, tag = 'input window, operand 3, single buffered']
    #allocation11 [shape = 's32[1]{0}', space=sflag, size = 0x4, scoped, tag = 'scoped memory for tpu_custom_call.1']
    #allocation12 [shape = 'u8[32768]{0}', space=vmem, size = 0x8000, scoped, tag = 'input window, operand 4, single buffered']
    #allocation13 [shape = 'u8[262144]{0}', space=vmem, size = 0x40000, scoped, tag = 'input window, operand 6, single buffered']
    #allocation14 [shape = 's32[1]{0}', space=sflag, size = 0x4, scoped, tag = 'scoped memory for tpu_custom_call.1']
    #allocation15 [shape = 'u8[393216]{0}', space=vmem, size = 0x60000, scoped, tag = 'input window, operand 8, single buffered']
    #allocation16 [shape = 'u8[98304]{0}', space=vmem, size = 0x18000, scoped, tag = 'input window, operand 10, single buffered']
    #allocation17 [shape = 's32[1]{0}', space=sflag, size = 0x4, scoped, tag = 'scoped memory for tpu_custom_call.1']
    #allocation18 [shape = 'u8[4096]{0}', space=vmem, size = 0x1000, scoped, tag = 'output window, operand 0, single buffered']
    #allocation19 [shape = 'u8[4096]{0}', space=vmem, size = 0x1000, scoped, tag = 'output window, operand 1, single buffered']
    #allocation20 [shape = 's32[1]{0}', space=sflag, size = 0x4, scoped, tag = 'scoped memory for tpu_custom_call.1']
    %23 = vsyncpa [#allocation8], 0
    %24 = vsyncpa [#allocation11], 0
    %25 = vsyncpa [#allocation14], 0
    %26 = vsyncpa [#allocation17], 0
    %27 = vsyncpa [#allocation9], 0
    %28 = vsyncpa [#allocation20], 0
    // Predicated region
    $region2: #{tpu_custom_call.1} parent=1 // pred_check
      _
    $region3: #{tpu_custom_call.1} parent=1 // pred_check_branch
      %30 = sbr.rel (0) target = $region5
    $region4: #{tpu_custom_call.1} parent=1 // pred_region
      %s32 = ssub.s32 128, 128
      %33 = vsyncadd [#allocation8], %s32
      %s35 = sshll.u32 [#allocation7], 4
      %s36 = int_to_ptr.vmem [resolvable:$true] %s35
      %38 = dma.hbm_to_vmem [thread:$0]  %s1, 128, %s36, [#allocation8]
    $region5: #{tpu_custom_call.1} parent=1 // pred_fallthru
      _
    // Predicated region
    $region6: #{tpu_custom_call.1} parent=1 // pred_check
      _
    $region7: #{tpu_custom_call.1} parent=1 // pred_check_branch
      %40 = sbr.rel (0) target = $region9
    $region8: #{tpu_custom_call.1} parent=1 // pred_region
      %s42 = ssub.s32 1024, 1024
      %43 = vsyncadd [#allocation11], %s42
      %s44 = sshll.u32 [#allocation10], 4
      %s45 = int_to_ptr.vmem [resolvable:$true] %s44
      %50 = dma.hbm_to_vmem [thread:$0]  %s3, 1024, %s45, [#allocation11], 128, 128, 8
    $region9: #{tpu_custom_call.1} parent=1 // pred_fallthru
      _
    // Predicated region
    $region10: #{tpu_custom_call.1} parent=1 // pred_check
      _
    $region11: #{tpu_custom_call.1} parent=1 // pred_check_branch
      %52 = sbr.rel (0) target = $region13
    $region12: #{tpu_custom_call.1} parent=1 // pred_region
      %s54 = ssub.s32 1024, 1024
      %55 = vsyncadd [#allocation11], %s54
      %s56 = sshll.u32 [#allocation12], 4
      %s57 = int_to_ptr.vmem [resolvable:$true] %s56
      %62 = dma.hbm_to_vmem [thread:$0]  %s4, 1024, %s57, [#allocation11], 128, 128, 8
    $region13: #{tpu_custom_call.1} parent=1 // pred_fallthru
      _
    // Predicated region
    $region14: #{tpu_custom_call.1} parent=1 // pred_check
      _
    $region15: #{tpu_custom_call.1} parent=1 // pred_check_branch
      %64 = sbr.rel (0) target = $region17
    $region16: #{tpu_custom_call.1} parent=1 // pred_region
      _
    $region17: #{tpu_custom_call.1} parent=1 // pred_fallthru
      _
    // Predicated region
    $region18: #{tpu_custom_call.1} parent=1 // pred_check
      _
    $region19: #{tpu_custom_call.1} parent=1 // pred_check_branch
      %66 = sbr.rel (0) target = $region21
    $region20: #{tpu_custom_call.1} parent=1 // pred_region
      %s68 = ssub.s32 8192, 8192
      %69 = vsyncadd [#allocation14], %s68
      %s70 = sshll.u32 [#allocation13], 4
      %s71 = int_to_ptr.vmem [resolvable:$true] %s70
      %76 = dma.hbm_to_vmem [thread:$0]  %s6, 8192, %s71, [#allocation14], 512, 512, 32
    $region21: #{tpu_custom_call.1} parent=1 // pred_fallthru
      _
    // Predicated region
    $region22: #{tpu_custom_call.1} parent=1 // pred_check
      _
    $region23: #{tpu_custom_call.1} parent=1 // pred_check_branch
      %78 = sbr.rel (0) target = $region25
    $region24: #{tpu_custom_call.1} parent=1 // pred_region
      _
    $region25: #{tpu_custom_call.1} parent=1 // pred_fallthru
      _
    // Predicated region
    $region26: #{tpu_custom_call.1} parent=1 // pred_check
      _
    $region27: #{tpu_custom_call.1} parent=1 // pred_check_branch
      %80 = sbr.rel (0) target = $region29
    $region28: #{tpu_custom_call.1} parent=1 // pred_region
      %s82 = ssub.s32 12288, 12288
      %83 = vsyncadd [#allocation14], %s82
      %s84 = sshll.u32 [#allocation15], 4
      %s85 = int_to_ptr.vmem [resolvable:$true] %s84
      %90 = dma.hbm_to_vmem [thread:$0]  %s8, 12288, %s85, [#allocation14], 384, 384, 24
    $region29: #{tpu_custom_call.1} parent=1 // pred_fallthru
      _
    // Predicated region
    $region30: #{tpu_custom_call.1} parent=1 // pred_check
      _
    $region31: #{tpu_custom_call.1} parent=1 // pred_check_branch
      %92 = sbr.rel (0) target = $region33
    $region32: #{tpu_custom_call.1} parent=1 // pred_region
      _
    $region33: #{tpu_custom_call.1} parent=1 // pred_fallthru
      _
    // Predicated region
    $region34: #{tpu_custom_call.1} parent=1 // pred_check
      _
    $region35: #{tpu_custom_call.1} parent=1 // pred_check_branch
      %94 = sbr.rel (0) target = $region37
    $region36: #{tpu_custom_call.1} parent=1 // pred_region
      %s96 = ssub.s32 3072, 3072
      %97 = vsyncadd [#allocation17], %s96
      %s98 = sshll.u32 [#allocation16], 4
      %s99 = int_to_ptr.vmem [resolvable:$true] %s98
      %104 = dma.hbm_to_vmem [thread:$0]  %s10, 3072, %s99, [#allocation17], 64, 64, 4
    $region37: #{tpu_custom_call.1} parent=1 // pred_fallthru
      _
    // Predicated region
    $region38: #{tpu_custom_call.1} parent=1 // pred_check
      _
    $region39: #{tpu_custom_call.1} parent=1 // pred_check_branch
      %106 = sbr.rel (0) target = $region41
    $region40: #{tpu_custom_call.1} parent=1 // pred_region
      _
    $region41: #{tpu_custom_call.1} parent=1 // pred_fallthru
      _
    // Predicated region
    $region42: #{tpu_custom_call.1} parent=1 // pred_check
      _
    $region43: #{tpu_custom_call.1} parent=1 // pred_check_branch
      %108 = sbr.rel (0) target = $region45
    $region44: #{tpu_custom_call.1} parent=1 // pred_region
      %109 = dma.done [#allocation8], 128
    $region45: #{tpu_custom_call.1} parent=1 // pred_fallthru
      _
    // Predicated region
    $region46: #{tpu_custom_call.1} parent=1 // pred_check
      _
    $region47: #{tpu_custom_call.1} parent=1 // pred_check_branch
      %111 = sbr.rel (0) target = $region49
    $region48: #{tpu_custom_call.1} parent=1 // pred_region
      %112 = dma.done [#allocation11], 1024
    $region49: #{tpu_custom_call.1} parent=1 // pred_fallthru
      _
    // Predicated region
    $region50: #{tpu_custom_call.1} parent=1 // pred_check
      _
    $region51: #{tpu_custom_call.1} parent=1 // pred_check_branch
      %114 = sbr.rel (0) target = $region53
    $region52: #{tpu_custom_call.1} parent=1 // pred_region
      %115 = dma.done [#allocation11], 1024
    $region53: #{tpu_custom_call.1} parent=1 // pred_fallthru
      _
    // Predicated region
    $region54: #{tpu_custom_call.1} parent=1 // pred_check
      _
    $region55: #{tpu_custom_call.1} parent=1 // pred_check_branch
      %117 = sbr.rel (0) target = $region57
    $region56: #{tpu_custom_call.1} parent=1 // pred_region
      %118 = dma.done [#allocation14], 8192
    $region57: #{tpu_custom_call.1} parent=1 // pred_fallthru
      _
    // Predicated region
    $region58: #{tpu_custom_call.1} parent=1 // pred_check
      _
    $region59: #{tpu_custom_call.1} parent=1 // pred_check_branch
      %120 = sbr.rel (0) target = $region61
    $region60: #{tpu_custom_call.1} parent=1 // pred_region
      %121 = dma.done [#allocation14], 12288
    $region61: #{tpu_custom_call.1} parent=1 // pred_fallthru
      _
    // Predicated region
    $region62: #{tpu_custom_call.1} parent=1 // pred_check
      _
    $region63: #{tpu_custom_call.1} parent=1 // pred_check_branch
      %123 = sbr.rel (0) target = $region65
    $region64: #{tpu_custom_call.1} parent=1 // pred_region
      %124 = dma.done [#allocation17], 3072
    $region65: #{tpu_custom_call.1} parent=1 // pred_fallthru
      _
    %p126 = scmp.eq.s32.totalorder 0, 0
    // Predicated region
    $region66: #{tpu_custom_call.1} parent=1 // pred_check
      %p127 = pneg %p126
    $region67: #{tpu_custom_call.1} parent=1 // pred_check_branch
      %129 = sbr.rel (%p127) target = $region69
    $region68: #{tpu_custom_call.1} parent=1 // pred_region
      %s130 = sld [smem:[#allocation6]]
      %s131 = sld [smem:[#allocation6 + $0x1]]
      %s132 = sld [smem:[#allocation6 + $0x2]]
      %s133 = sld [smem:[#allocation6 + $0x3]]
      %s134 = sld [smem:[#allocation6 + $0x4]]
      %s135 = sld [smem:[#allocation6 + $0x5]]
      %s136 = sld [smem:[#allocation6 + $0x6]]
      %s137 = sld [smem:[#allocation6 + $0x7]]
      %s138 = smul.addr %s130, 16
      %s139 = scalar_lea.hbm %s2, %s138
      // Predicated region
      $region70: #{tpu_custom_call.1} parent=68 // pred_check
        _
      $region71: #{tpu_custom_call.1} parent=68 // pred_check_branch
        %141 = sbr.rel target = $region73
      $region72: #{tpu_custom_call.1} parent=68 // pred_region
        %142 = sst [smem:[#allocation23]] [#allocation22]
        %143 = sst [smem:[#allocation24]] [#allocation21]
      $region73: #{tpu_custom_call.1} parent=68 // pred_fallthru
        _
      %145 = shalt.err (0)
      %s147 = sshll.u32 [#allocation2], 4
      %s148 = int_to_ptr.vmem [resolvable:$true] %s147
      %150 = dma.hbm_to_vmem [thread:$0]  %s139, 16, %s148, [#allocation3]
      %s151 = smul.addr %s131, 16
      %s152 = scalar_lea.hbm %s2, %s151
      %s153 = scalar_lea.vmem [#allocation2], 1
      %s154 = scalar_lea.sflag [#allocation3], 1
      // Predicated region
      $region74: #{tpu_custom_call.1} parent=68 // pred_check
        _
      $region75: #{tpu_custom_call.1} parent=68 // pred_check_branch
        %156 = sbr.rel target = $region77
      $region76: #{tpu_custom_call.1} parent=68 // pred_region
        %157 = sst [smem:[#allocation23]] [#allocation26]
        %158 = sst [smem:[#allocation24]] [#allocation25]
      $region77: #{tpu_custom_call.1} parent=68 // pred_fallthru
        _
      %160 = shalt.err (0)
      %s162 = sshll.u32 %s153, 4
      %s163 = int_to_ptr.vmem [resolvable:$true] %s162
      %165 = dma.hbm_to_vmem [thread:$0]  %s152, 16, %s163, %s154
      %s166 = smul.addr %s132, 16
      %s167 = scalar_lea.hbm %s2, %s166
      %s168 = scalar_lea.vmem [#allocation2], 2
      %s169 = scalar_lea.sflag [#allocation3], 2
      // Predicated region
      $region78: #{tpu_custom_call.1} parent=68 // pred_check
        _
      $region79: #{tpu_custom_call.1} parent=68 // pred_check_branch
        %171 = sbr.rel target = $region81
      $region80: #{tpu_custom_call.1} parent=68 // pred_region
        %172 = sst [smem:[#allocation23]] [#allocation28]
        %173 = sst [smem:[#allocation24]] [#allocation27]
      $region81: #{tpu_custom_call.1} parent=68 // pred_fallthru
        _
      %175 = shalt.err (0)
      %s177 = sshll.u32 %s168, 4
      %s178 = int_to_ptr.vmem [resolvable:$true] %s177
      %180 = dma.hbm_to_vmem [thread:$0]  %s167, 16, %s178, %s169
      %s181 = smul.addr %s133, 16
      %s182 = scalar_lea.hbm %s2, %s181
      %s183 = scalar_lea.vmem [#allocation2], 3
      %s184 = scalar_lea.sflag [#allocation3], 3
      // Predicated region
      $region82: #{tpu_custom_call.1} parent=68 // pred_check
        _
      $region83: #{tpu_custom_call.1} parent=68 // pred_check_branch
        %186 = sbr.rel target = $region85
      $region84: #{tpu_custom_call.1} parent=68 // pred_region
        %187 = sst [smem:[#allocation23]] [#allocation30]
        %188 = sst [smem:[#allocation24]] [#allocation29]
      $region85: #{tpu_custom_call.1} parent=68 // pred_fallthru
        _
      %190 = shalt.err (0)
      %s192 = sshll.u32 %s183, 4
      %s193 = int_to_ptr.vmem [resolvable:$true] %s192
      %195 = dma.hbm_to_vmem [thread:$0]  %s182, 16, %s193, %s184
      %s196 = smul.addr %s134, 16
      %s197 = scalar_lea.hbm %s2, %s196
      %s198 = scalar_lea.vmem [#allocation2], 4
      %s199 = scalar_lea.sflag [#allocation3], 4
      // Predicated region
      $region86: #{tpu_custom_call.1} parent=68 // pred_check
        _
      $region87: #{tpu_custom_call.1} parent=68 // pred_check_branch
        %201 = sbr.rel target = $region89
      $region88: #{tpu_custom_call.1} parent=68 // pred_region
        %202 = sst [smem:[#allocation23]] [#allocation32]
        %203 = sst [smem:[#allocation24]] [#allocation31]
      $region89: #{tpu_custom_call.1} parent=68 // pred_fallthru
        _
      %205 = shalt.err (0)
      %s207 = sshll.u32 %s198, 4
      %s208 = int_to_ptr.vmem [resolvable:$true] %s207
      %210 = dma.hbm_to_vmem [thread:$0]  %s197, 16, %s208, %s199
      %s211 = smul.addr %s135, 16
      %s212 = scalar_lea.hbm %s2, %s211
      %s213 = scalar_lea.vmem [#allocation2], 5
      %s214 = scalar_lea.sflag [#allocation3], 5
      // Predicated region
      $region90: #{tpu_custom_call.1} parent=68 // pred_check
        _
      $region91: #{tpu_custom_call.1} parent=68 // pred_check_branch
        %216 = sbr.rel target = $region93
      $region92: #{tpu_custom_call.1} parent=68 // pred_region
        %217 = sst [smem:[#allocation23]] [#allocation34]
        %218 = sst [smem:[#allocation24]] [#allocation33]
      $region93: #{tpu_custom_call.1} parent=68 // pred_fallthru
        _
      %220 = shalt.err (0)
      %s222 = sshll.u32 %s213, 4
      %s223 = int_to_ptr.vmem [resolvable:$true] %s222
      %225 = dma.hbm_to_vmem [thread:$0]  %s212, 16, %s223, %s214
      %s226 = smul.addr %s136, 16
      %s227 = scalar_lea.hbm %s2, %s226
      %s228 = scalar_lea.vmem [#allocation2], 6
      %s229 = scalar_lea.sflag [#allocation3], 6
      // Predicated region
      $region94: #{tpu_custom_call.1} parent=68 // pred_check
        _
      $region95: #{tpu_custom_call.1} parent=68 // pred_check_branch
        %231 = sbr.rel target = $region97
      $region96: #{tpu_custom_call.1} parent=68 // pred_region
        %232 = sst [smem:[#allocation23]] [#allocation36]
        %233 = sst [smem:[#allocation24]] [#allocation35]
      $region97: #{tpu_custom_call.1} parent=68 // pred_fallthru
        _
      %235 = shalt.err (0)
      %s237 = sshll.u32 %s228, 4
      %s238 = int_to_ptr.vmem [resolvable:$true] %s237
      %240 = dma.hbm_to_vmem [thread:$0]  %s227, 16, %s238, %s229
      %s241 = smul.addr %s137, 16
      %s242 = scalar_lea.hbm %s2, %s241
      %s243 = scalar_lea.vmem [#allocation2], 7
      %s244 = scalar_lea.sflag [#allocation3], 7
      // Predicated region
      $region98: #{tpu_custom_call.1} parent=68 // pred_check
        _
      $region99: #{tpu_custom_call.1} parent=68 // pred_check_branch
        %246 = sbr.rel target = $region101
      $region100: #{tpu_custom_call.1} parent=68 // pred_region
        %247 = sst [smem:[#allocation23]] [#allocation38]
        %248 = sst [smem:[#allocation24]] [#allocation37]
      $region101: #{tpu_custom_call.1} parent=68 // pred_fallthru
        _
      %250 = shalt.err (0)
      %s252 = sshll.u32 %s243, 4
      %s253 = int_to_ptr.vmem [resolvable:$true] %s252
      %255 = dma.hbm_to_vmem [thread:$0]  %s242, 16, %s253, %s244
      %v256 = vld [vmem:[#allocation7] sm:$0xff]
      %v257 = vld [vmem:[#allocation13] sm:$0xff]
      %v258 = vld [vmem:[#allocation13 + $0x8] sm:$0xff]
      %v259 = vld [vmem:[#allocation13 + $0x10] sm:$0xff]
      %v260 = vld [vmem:[#allocation13 + $0x18] sm:$0xff]
      %v261 = vld [vmem:[#allocation13 + $0x20] sm:$0xff]
      %v262 = vld [vmem:[#allocation13 + $0x28] sm:$0xff]
      %v263 = vld [vmem:[#allocation13 + $0x30] sm:$0xff]
      %v264 = vld [vmem:[#allocation13 + $0x38] sm:$0xff]
      %v265 = vld [vmem:[#allocation13 + $0x40] sm:$0xff]
      %v266 = vld [vmem:[#allocation13 + $0x48] sm:$0xff]
      %v267 = vld [vmem:[#allocation13 + $0x50] sm:$0xff]
      %v268 = vld [vmem:[#allocation13 + $0x58] sm:$0xff]
      %v269 = vld [vmem:[#allocation13 + $0x60] sm:$0xff]
      %v270 = vld [vmem:[#allocation13 + $0x68] sm:$0xff]
      %v271 = vld [vmem:[#allocation13 + $0x70] sm:$0xff]
      %v272 = vld [vmem:[#allocation13 + $0x78] sm:$0xff]
      %v273 = vld [vmem:[#allocation13 + $0x80] sm:$0xff]
      %v274 = vld [vmem:[#allocation13 + $0x88] sm:$0xff]
      %v275 = vld [vmem:[#allocation13 + $0x90] sm:$0xff]
      %v276 = vld [vmem:[#allocation13 + $0x98] sm:$0xff]
      %v277 = vld [vmem:[#allocation13 + $0xa0] sm:$0xff]
      %v278 = vld [vmem:[#allocation13 + $0xa8] sm:$0xff]
      %v279 = vld [vmem:[#allocation13 + $0xb0] sm:$0xff]
      %v280 = vld [vmem:[#allocation13 + $0xb8] sm:$0xff]
      %v281 = vld [vmem:[#allocation13 + $0xc0] sm:$0xff]
      %v282 = vld [vmem:[#allocation13 + $0xc8] sm:$0xff]
      %v283 = vld [vmem:[#allocation13 + $0xd0] sm:$0xff]
      %v284 = vld [vmem:[#allocation13 + $0xd8] sm:$0xff]
      %v285 = vld [vmem:[#allocation13 + $0xe0] sm:$0xff]
      %v286 = vld [vmem:[#allocation13 + $0xe8] sm:$0xff]
      %v287 = vld [vmem:[#allocation13 + $0xf0] sm:$0xff]
      %v288 = vld [vmem:[#allocation13 + $0xf8] sm:$0xff]
      %v289 = vld [vmem:[#allocation13 + $0x100] sm:$0xff]
      %v290 = vld [vmem:[#allocation13 + $0x108] sm:$0xff]
      %v291 = vld [vmem:[#allocation13 + $0x110] sm:$0xff]
      %v292 = vld [vmem:[#allocation13 + $0x118] sm:$0xff]
      %v293 = vld [vmem:[#allocation13 + $0x120] sm:$0xff]
      %v294 = vld [vmem:[#allocation13 + $0x128] sm:$0xff]
      %v295 = vld [vmem:[#allocation13 + $0x130] sm:$0xff]
      %v296 = vld [vmem:[#allocation13 + $0x138] sm:$0xff]
      %v297 = vld [vmem:[#allocation13 + $0x140] sm:$0xff]
      %v298 = vld [vmem:[#allocation13 + $0x148] sm:$0xff]
      %v299 = vld [vmem:[#allocation13 + $0x150] sm:$0xff]
      %v300 = vld [vmem:[#allocation13 + $0x158] sm:$0xff]
      %v301 = vld [vmem:[#allocation13 + $0x160] sm:$0xff]
      %v302 = vld [vmem:[#allocation13 + $0x168] sm:$0xff]
      %v303 = vld [vmem:[#allocation13 + $0x170] sm:$0xff]
      %v304 = vld [vmem:[#allocation13 + $0x178] sm:$0xff]
      %v305 = vld [vmem:[#allocation13 + $0x180] sm:$0xff]
      %v306 = vld [vmem:[#allocation13 + $0x188] sm:$0xff]
      %v307 = vld [vmem:[#allocation13 + $0x190] sm:$0xff]
      %v308 = vld [vmem:[#allocation13 + $0x198] sm:$0xff]
      %v309 = vld [vmem:[#allocation13 + $0x1a0] sm:$0xff]
      %v310 = vld [vmem:[#allocation13 + $0x1a8] sm:$0xff]
      %v311 = vld [vmem:[#allocation13 + $0x1b0] sm:$0xff]
      %v312 = vld [vmem:[#allocation13 + $0x1b8] sm:$0xff]
      %v313 = vld [vmem:[#allocation13 + $0x1c0] sm:$0xff]
      %v314 = vld [vmem:[#allocation13 + $0x1c8] sm:$0xff]
      %v315 = vld [vmem:[#allocation13 + $0x1d0] sm:$0xff]
      %v316 = vld [vmem:[#allocation13 + $0x1d8] sm:$0xff]
      %v317 = vld [vmem:[#allocation13 + $0x1e0] sm:$0xff]
      %v318 = vld [vmem:[#allocation13 + $0x1e8] sm:$0xff]
      %v319 = vld [vmem:[#allocation13 + $0x1f0] sm:$0xff]
      %v320 = vld [vmem:[#allocation13 + $0x1f8] sm:$0xff]
      %v321 = vld [vmem:[%s7] sm:$0xf]
      %v323 = vlaneseq
      %v324 = vshrl.u32 %v323, 7
      %v325 = vsub.s32 0, %v324
      %v326 = vrot.slane %v321, %v325
      %v327 = vlaneseq
      %v328 = vshrl.u32 %v327, 7
      %v329 = vsub.s32 1, %v328
      %v330 = vrot.slane %v321, %v329
      %v331 = vlaneseq
      %v332 = vshrl.u32 %v331, 7
      %v333 = vsub.s32 2, %v332
      %v334 = vrot.slane %v321, %v333
      %v335 = vlaneseq
      %v336 = vshrl.u32 %v335, 7
      %v337 = vsub.s32 3, %v336
      %v338 = vrot.slane %v321, %v337
      %343 = vmatprep.subr.mxu0 %v258
      %344 = vmatpush1.msra.mxu0 %v257
      %345 = vmatprep.subr.mxu0 %v262
      %346 = vmatpush1.msra.mxu0 %v261
      %347 = vmatprep.subr.mxu0 %v266
      %348 = vmatpush1.msra.mxu0 %v265
      %349 = vmatprep.subr.mxu0 %v270
      %350 = vmatpush1.msra.mxu0 %v269
      %351 = vmatprep.subr.mxu0 %v274
      %352 = vmatpush1.msra.mxu0 %v273
      %353 = vmatprep.subr.mxu0 %v278
      %354 = vmatpush1.msra.mxu0 %v277
      %355 = vmatprep.subr.mxu0 %v282
      %356 = vmatpush1.msra.mxu0 %v281
      %357 = vmatprep.subr.mxu0 %v286
      %358 = vmatpush1.msra.mxu0 %v285
      %359 = vmatprep.subr.mxu0 %v290
      %360 = vmatpush1.msra.mxu0 %v289
      %361 = vmatprep.subr.mxu0 %v294
      %362 = vmatpush1.msra.mxu0 %v293
      %363 = vmatprep.subr.mxu0 %v298
      %364 = vmatpush1.msra.mxu0 %v297
      %365 = vmatprep.subr.mxu0 %v302
      %366 = vmatpush1.msra.mxu0 %v301
      %367 = vmatprep.subr.mxu0 %v306
      %368 = vmatpush1.msra.mxu0 %v305
      %369 = vmatprep.subr.mxu0 %v310
      %370 = vmatpush1.msra.mxu0 %v309
      %371 = vmatprep.subr.mxu0 %v314
      %372 = vmatpush1.msra.mxu0 %v313
      %373 = vmatprep.subr.mxu0 %v318
      %374 = vmatpush1.msra.mxu0 %v317
      %375 = vmatprep.subr.mxu0 0.0
      %376 = vmatpush1.msra.mxu0 0.0
      %377 = vmatprep.subr.mxu0 0.0
      %378 = vmatpush1.msra.mxu0 0.0
      %379 = vmatprep.subr.mxu0 0.0
      %380 = vmatpush1.msra.mxu0 0.0
      %381 = vmatprep.subr.mxu0 0.0
      %382 = vmatpush1.msra.mxu0 0.0
      %383 = vmatprep.subr.mxu0 0.0
      %384 = vmatpush1.msra.mxu0 0.0
      %385 = vmatprep.subr.mxu0 0.0
      %386 = vmatpush1.msra.mxu0 0.0
      %387 = vmatprep.subr.mxu0 0.0
      %388 = vmatpush1.msra.mxu0 0.0
      %389 = vmatprep.subr.mxu0 0.0
      %390 = vmatpush1.msra.mxu0 0.0
      %391 = vmatprep.subr.mxu0 0.0
      %392 = vmatpush1.msra.mxu0 0.0
      %393 = vmatprep.subr.mxu0 0.0
      %394 = vmatpush1.msra.mxu0 0.0
      %395 = vmatprep.subr.mxu0 0.0
      %396 = vmatpush1.msra.mxu0 0.0
      %397 = vmatprep.subr.mxu0 0.0
      %398 = vmatpush1.msra.mxu0 0.0
      %399 = vmatprep.subr.mxu0 0.0
      %400 = vmatpush1.msra.mxu0 0.0
      %401 = vmatprep.subr.mxu0 0.0
      %402 = vmatpush1.msra.mxu0 0.0
      %403 = vmatprep.subr.mxu0 0.0
      %404 = vmatpush1.msra.mxu0 0.0
      %405 = vmatprep.subr.mxu0 0.0
      %406 = vmatpush1.msra.mxu0 0.0
      %407 = vmatprep.mubr.f32.mxu0 0.0
      %408 = vmatmul.mubr.f32.gmra.mrb[0].mxu0 %v256
      %v409 = vpop.f32.mrb[0].mxu0
      %v410 = vadd.f32 %v326, %v409
      %v411 = vpop.f32.mrb[0].mxu0
      %v412 = vadd.f32 %v330, %v411
      %413 = vdwg.mxu0
      %414 = vmatprep.subr.mxu0 %v260
      %415 = vmatpush1.msra.mxu0 %v259
      %416 = vmatprep.subr.mxu0 %v264
      %417 = vmatpush1.msra.mxu0 %v263
      %418 = vmatprep.subr.mxu0 %v268
      %419 = vmatpush1.msra.mxu0 %v267
      %420 = vmatprep.subr.mxu0 %v272
      %421 = vmatpush1.msra.mxu0 %v271
      %422 = vmatprep.subr.mxu0 %v276
      %423 = vmatpush1.msra.mxu0 %v275
      %424 = vmatprep.subr.mxu0 %v280
      %425 = vmatpush1.msra.mxu0 %v279
      %426 = vmatprep.subr.mxu0 %v284
      %427 = vmatpush1.msra.mxu0 %v283
      %428 = vmatprep.subr.mxu0 %v288
      %429 = vmatpush1.msra.mxu0 %v287
      %430 = vmatprep.subr.mxu0 %v292
      %431 = vmatpush1.msra.mxu0 %v291
      %432 = vmatprep.subr.mxu0 %v296
      %433 = vmatpush1.msra.mxu0 %v295
      %434 = vmatprep.subr.mxu0 %v300
      %435 = vmatpush1.msra.mxu0 %v299
      %436 = vmatprep.subr.mxu0 %v304
      %437 = vmatpush1.msra.mxu0 %v303
      %438 = vmatprep.subr.mxu0 %v308
      %439 = vmatpush1.msra.mxu0 %v307
      %440 = vmatprep.subr.mxu0 %v312
      %441 = vmatpush1.msra.mxu0 %v311
      %442 = vmatprep.subr.mxu0 %v316
      %443 = vmatpush1.msra.mxu0 %v315
      %444 = vmatprep.subr.mxu0 %v320
      %445 = vmatpush1.msra.mxu0 %v319
      %446 = vmatprep.subr.mxu0 0.0
      %447 = vmatpush1.msra.mxu0 0.0
      %448 = vmatprep.subr.mxu0 0.0
      %449 = vmatpush1.msra.mxu0 0.0
      %450 = vmatprep.subr.mxu0 0.0
      %451 = vmatpush1.msra.mxu0 0.0
      %452 = vmatprep.subr.mxu0 0.0
      %453 = vmatpush1.msra.mxu0 0.0
      %454 = vmatprep.subr.mxu0 0.0
      %455 = vmatpush1.msra.mxu0 0.0
      %456 = vmatprep.subr.mxu0 0.0
      %457 = vmatpush1.msra.mxu0 0.0
      %458 = vmatprep.subr.mxu0 0.0
      %459 = vmatpush1.msra.mxu0 0.0
      %460 = vmatprep.subr.mxu0 0.0
      %461 = vmatpush1.msra.mxu0 0.0
      %462 = vmatprep.subr.mxu0 0.0
      %463 = vmatpush1.msra.mxu0 0.0
      %464 = vmatprep.subr.mxu0 0.0
      %465 = vmatpush1.msra.mxu0 0.0
      %466 = vmatprep.subr.mxu0 0.0
      %467 = vmatpush1.msra.mxu0 0.0
      %468 = vmatprep.subr.mxu0 0.0
      %469 = vmatpush1.msra.mxu0 0.0
      %470 = vmatprep.subr.mxu0 0.0
      %471 = vmatpush1.msra.mxu0 0.0
      %472 = vmatprep.subr.mxu0 0.0
      %473 = vmatpush1.msra.mxu0 0.0
      %474 = vmatprep.subr.mxu0 0.0
      %475 = vmatpush1.msra.mxu0 0.0
      %476 = vmatprep.subr.mxu0 0.0
      %477 = vmatpush1.msra.mxu0 0.0
      %478 = vmatprep.mubr.f32.mxu0 0.0
      %479 = vmatmul.mubr.f32.gmra.mrb[0].mxu0 %v256
      %v480 = vpop.f32.mrb[0].mxu0
      %v481 = vadd.f32 %v334, %v480
      %v482 = vpop.f32.mrb[0].mxu0
      %v483 = vadd.f32 %v338, %v482
      %484 = vdwg.mxu0
      %v485 = vld [vmem:[#allocation12] sm:$0xff]
      %v486 = vld [vmem:[#allocation12 + $0x8] sm:$0xff]
      %v487 = vld [vmem:[#allocation12 + $0x10] sm:$0xff]
      %v488 = vld [vmem:[#allocation12 + $0x18] sm:$0xff]
      %v489 = vld [vmem:[#allocation12 + $0x20] sm:$0xff]
      %v490 = vld [vmem:[#allocation12 + $0x28] sm:$0xff]
      %v491 = vld [vmem:[#allocation12 + $0x30] sm:$0xff]
      %v492 = vld [vmem:[#allocation12 + $0x38] sm:$0xff]
      %v494 = vcombine.high %v410, %v410
      %v496 = vunpack.c.l.s4 1966171168
      %v497 = vunpack.c.0.s8 %v496
      %v498 = vlaneseq
      %v499 = vshrl.u32 %v498, 7
      %v500 = vsub.s32 %v497, %v499
      %v501 = vrot.slane %v410, %v500
      %v503 = vunpack.c.l.s4 1966171168
      %v504 = vunpack.c.0.s8 %v503
      %v505 = vlaneseq
      %v506 = vshrl.u32 %v505, 7
      %v507 = vsub.s32 %v504, %v506
      %v508 = vrot.slane %v494, %v507
      %v509 = vcombine.high %v501, %v501
      %v510 = vcombine.high %v508, %v508
      %v512 = vunpack.c.l.s4 1966171168
      %v513 = vunpack.c.0.s8 %v512
      %v514 = vlaneseq
      %v515 = vshrl.u32 %v514, 7
      %v516 = vsub.s32 %v513, %v515
      %v517 = vrot.slane %v501, %v516
      %v519 = vunpack.c.l.s4 1966171168
      %v520 = vunpack.c.0.s8 %v519
      %v521 = vlaneseq
      %v522 = vshrl.u32 %v521, 7
      %v523 = vsub.s32 %v520, %v522
      %v524 = vrot.slane %v508, %v523
      %v526 = vunpack.c.l.s4 1966171168
      %v527 = vunpack.c.0.s8 %v526
      %v528 = vlaneseq
      %v529 = vshrl.u32 %v528, 7
      %v530 = vsub.s32 %v527, %v529
      %v531 = vrot.slane %v509, %v530
      %v533 = vunpack.c.l.s4 1966171168
      %v534 = vunpack.c.0.s8 %v533
      %v535 = vlaneseq
      %v536 = vshrl.u32 %v535, 7
      %v537 = vsub.s32 %v534, %v536
      %v538 = vrot.slane %v510, %v537
      %v539 = vcombine.high %v517, %v517
      %v540 = vcombine.high %v524, %v524
      %v541 = vcombine.high %v531, %v531
      %v542 = vcombine.high %v538, %v538
      %v543 = vlaneseq
      %v544 = vshrl.u32 %v543, 7
      %v545 = vsub.s32 0, %v544
      %v546 = vrot.slane %v517, %v545
      %v547 = vlaneseq
      %v548 = vshrl.u32 %v547, 7
      %v549 = vsub.s32 0, %v548
      %v550 = vrot.slane %v531, %v549
      %v551 = vlaneseq
      %v552 = vshrl.u32 %v551, 7
      %v553 = vsub.s32 0, %v552
      %v554 = vrot.slane %v539, %v553
      %v555 = vlaneseq
      %v556 = vshrl.u32 %v555, 7
      %v557 = vsub.s32 0, %v556
      %v558 = vrot.slane %v541, %v557
      %v559 = vlaneseq
      %v560 = vshrl.u32 %v559, 7
      %v561 = vsub.s32 0, %v560
      %v562 = vrot.slane %v524, %v561
      %v563 = vlaneseq
      %v564 = vshrl.u32 %v563, 7
      %v565 = vsub.s32 0, %v564
      %v566 = vrot.slane %v538, %v565
      %v567 = vlaneseq
      %v568 = vshrl.u32 %v567, 7
      %v569 = vsub.s32 0, %v568
      %v570 = vrot.slane %v540, %v569
      %v571 = vlaneseq
      %v572 = vshrl.u32 %v571, 7
      %v573 = vsub.s32 0, %v572
      %v574 = vrot.slane %v542, %v573
      %v583 = vadd.f32 %v485, %v546
      %v584 = vadd.f32 %v486, %v550
      %v585 = vadd.f32 %v487, %v554
      %v586 = vadd.f32 %v488, %v558
      %v587 = vadd.f32 %v489, %v562
      %v588 = vadd.f32 %v490, %v566
      %v589 = vadd.f32 %v491, %v570
      %v590 = vadd.f32 %v492, %v574
      %v591 = vtanh.pop %v583
      %v592 = vtanh.pop %v584
      %v593 = vtanh.pop %v585
      %v594 = vtanh.pop %v586
      %v595 = vtanh.pop %v587
      %v596 = vtanh.pop %v588
      %v597 = vtanh.pop %v589
      %v598 = vtanh.pop %v590
      %v599 = vld [vmem:[%s5] sm:$0x1]
      %v601 = vlaneseq
      %v602 = vshrl.u32 %v601, 7
      %v603 = vsub.s32 0, %v602
      %v604 = vrot.slane %v599, %v603
      %v606 = vmul.f32 %v591, %v604
      %v607 = vmul.f32 %v592, %v604
      %v608 = vmul.f32 %v593, %v604
      %v609 = vmul.f32 %v594, %v604
      %v610 = vmul.f32 %v595, %v604
      %v611 = vmul.f32 %v596, %v604
      %v612 = vmul.f32 %v597, %v604
      %v613 = vmul.f32 %v598, %v604
      %614 = vadd.xlane.f32.xlu0 %v606
      %v615 = vpop.xlane.xlu0 %614
      %616 = vadd.xlane.f32.xlu0 %v607
      %v617 = vpop.xlane.xlu0 %616
      %618 = vadd.xlane.f32.xlu0 %v608
      %v619 = vpop.xlane.xlu0 %618
      %620 = vadd.xlane.f32.xlu0 %v609
      %v621 = vpop.xlane.xlu0 %620
      %622 = vadd.xlane.f32.xlu0 %v610
      %v623 = vpop.xlane.xlu0 %622
      %624 = vadd.xlane.f32.xlu0 %v611
      %v625 = vpop.xlane.xlu0 %624
      %626 = vadd.xlane.f32.xlu0 %v612
      %v627 = vpop.xlane.xlu0 %626
      %628 = vadd.xlane.f32.xlu0 %v613
      %v629 = vpop.xlane.xlu0 %628
      %v638 = vlaneseq
      %v639 = vand.u32 %v638, 127
      %v640 = vlaneseq
      %v641 = vshrl.u32 %v640, 7
      %v642 = vsub.s32 %v639, %v641
      %v643 = vrot.slane %v615, %v642
      %v644 = vlaneseq
      %v645 = vshrl.u32 %v644, 7
      %v646 = vsub.s32 %v639, %v645
      %v647 = vrot.slane %v617, %v646
      %v648 = vlaneseq
      %v649 = vshrl.u32 %v648, 7
      %v650 = vsub.s32 %v639, %v649
      %v651 = vrot.slane %v619, %v650
      %v652 = vlaneseq
      %v653 = vshrl.u32 %v652, 7
      %v654 = vsub.s32 %v639, %v653
      %v655 = vrot.slane %v621, %v654
      %v656 = vlaneseq
      %v657 = vshrl.u32 %v656, 7
      %v658 = vsub.s32 %v639, %v657
      %v659 = vrot.slane %v623, %v658
      %v660 = vlaneseq
      %v661 = vshrl.u32 %v660, 7
      %v662 = vsub.s32 %v639, %v661
      %v663 = vrot.slane %v625, %v662
      %v664 = vlaneseq
      %v665 = vshrl.u32 %v664, 7
      %v666 = vsub.s32 %v639, %v665
      %v667 = vrot.slane %v627, %v666
      %v668 = vlaneseq
      %v669 = vshrl.u32 %v668, 7
      %v670 = vsub.s32 %v639, %v669
      %v671 = vrot.slane %v629, %v670
      %vm672 = vcmask 1041409
      %v673 = vsel %vm672, %v647, %v643
      %vm674 = vcmask 1042434
      %v675 = vsel %vm674, %v651, %v673
      %vm676 = vcmask 1043459
      %v677 = vsel %vm676, %v655, %v675
      %vm678 = vcmask 1044484
      %v679 = vsel %vm678, %v659, %v677
      %vm680 = vcmask 1045509
      %v681 = vsel %vm680, %v663, %v679
      %vm682 = vcmask 1046534
      %v683 = vsel %vm682, %v667, %v681
      %vm684 = vcmask 1047559
      %v685 = vsel %vm684, %v671, %v683
      %vm687 = vcmask 64512
      %v688 = vsel %vm687, %v685, -inf
      %689 = vmax.xlane.f32.xlu0 %v688
      %v690 = vpop.xlane.xlu0 %689
      %v692 = vlaneseq
      %v693 = vshrl.u32 %v692, 7
      %v694 = vsub.s32 0, %v693
      %v695 = vrot.slane %v690, %v694
      %v696 = vlaneseq
      %v697 = vshrl.u32 %v696, 7
      %v698 = vsub.s32 1, %v697
      %v699 = vrot.slane %v690, %v698
      %v700 = vlaneseq
      %v701 = vshrl.u32 %v700, 7
      %v702 = vsub.s32 2, %v701
      %v703 = vrot.slane %v690, %v702
      %v704 = vlaneseq
      %v705 = vshrl.u32 %v704, 7
      %v706 = vsub.s32 3, %v705
      %v707 = vrot.slane %v690, %v706
      %v708 = vlaneseq
      %v709 = vshrl.u32 %v708, 7
      %v710 = vsub.s32 4, %v709
      %v711 = vrot.slane %v690, %v710
      %v712 = vlaneseq
      %v713 = vshrl.u32 %v712, 7
      %v714 = vsub.s32 5, %v713
      %v715 = vrot.slane %v690, %v714
      %v716 = vlaneseq
      %v717 = vshrl.u32 %v716, 7
      %v718 = vsub.s32 6, %v717
      %v719 = vrot.slane %v690, %v718
      %v720 = vlaneseq
      %v721 = vshrl.u32 %v720, 7
      %v722 = vsub.s32 7, %v721
      %v723 = vrot.slane %v690, %v722
      %v732 = vsub.f32 %v615, %v695
      %v733 = vsub.f32 %v617, %v699
      %v734 = vsub.f32 %v619, %v703
      %v735 = vsub.f32 %v621, %v707
      %v736 = vsub.f32 %v623, %v711
      %v737 = vsub.f32 %v625, %v715
      %v738 = vsub.f32 %v627, %v719
      %v739 = vsub.f32 %v629, %v723
      %v740 = vmul.f32 %v732, 1.442695
      %v741 = vpow.pop %v740
      %v742 = vmul.f32 %v733, 1.442695
      %v743 = vpow.pop %v742
      %v744 = vmul.f32 %v734, 1.442695
      %v745 = vpow.pop %v744
      %v746 = vmul.f32 %v735, 1.442695
      %v747 = vpow.pop %v746
      %v748 = vmul.f32 %v736, 1.442695
      %v749 = vpow.pop %v748
      %v750 = vmul.f32 %v737, 1.442695
      %v751 = vpow.pop %v750
      %v752 = vmul.f32 %v738, 1.442695
      %v753 = vpow.pop %v752
      %v754 = vmul.f32 %v739, 1.442695
      %v755 = vpow.pop %v754
      %764 = vset.pattern.permute.xlu0 0
      %765 = vperm.xlu0 %764, %v741
      %v766 = vpop.permute.xlu0 %765
      %767 = vset.pattern.permute.xlu0 0
      %768 = vperm.xlu0 %767, %v743
      %v769 = vpop.permute.xlu0 %768
      %770 = vset.pattern.permute.xlu0 0
      %771 = vperm.xlu0 %770, %v745
      %v772 = vpop.permute.xlu0 %771
      %773 = vset.pattern.permute.xlu0 0
      %774 = vperm.xlu0 %773, %v747
      %v775 = vpop.permute.xlu0 %774
      %776 = vset.pattern.permute.xlu0 0
      %777 = vperm.xlu0 %776, %v749
      %v778 = vpop.permute.xlu0 %777
      %779 = vset.pattern.permute.xlu0 0
      %780 = vperm.xlu0 %779, %v751
      %v781 = vpop.permute.xlu0 %780
      %782 = vset.pattern.permute.xlu0 0
      %783 = vperm.xlu0 %782, %v753
      %v784 = vpop.permute.xlu0 %783
      %785 = vset.pattern.permute.xlu0 0
      %786 = vperm.xlu0 %785, %v755
      %v787 = vpop.permute.xlu0 %786
      %v788 = vlaneseq
      %v789 = vshrl.u32 %v788, 7
      %v790 = vsub.s32 %v639, %v789
      %v791 = vrot.slane %v766, %v790
      %v792 = vlaneseq
      %v793 = vshrl.u32 %v792, 7
      %v794 = vsub.s32 %v639, %v793
      %v795 = vrot.slane %v769, %v794
      %v796 = vlaneseq
      %v797 = vshrl.u32 %v796, 7
      %v798 = vsub.s32 %v639, %v797
      %v799 = vrot.slane %v772, %v798
      %v800 = vlaneseq
      %v801 = vshrl.u32 %v800, 7
      %v802 = vsub.s32 %v639, %v801
      %v803 = vrot.slane %v775, %v802
      %v804 = vlaneseq
      %v805 = vshrl.u32 %v804, 7
      %v806 = vsub.s32 %v639, %v805
      %v807 = vrot.slane %v778, %v806
      %v808 = vlaneseq
      %v809 = vshrl.u32 %v808, 7
      %v810 = vsub.s32 %v639, %v809
      %v811 = vrot.slane %v781, %v810
      %v812 = vlaneseq
      %v813 = vshrl.u32 %v812, 7
      %v814 = vsub.s32 %v639, %v813
      %v815 = vrot.slane %v784, %v814
      %v816 = vlaneseq
      %v817 = vshrl.u32 %v816, 7
      %v818 = vsub.s32 %v639, %v817
      %v819 = vrot.slane %v787, %v818
      %v820 = vsel %vm672, %v795, %v791
      %v821 = vsel %vm674, %v799, %v820
      %v822 = vsel %vm676, %v803, %v821
      %v823 = vsel %vm678, %v807, %v822
      %v824 = vsel %vm680, %v811, %v823
      %v825 = vsel %vm682, %v815, %v824
      %v826 = vsel %vm684, %v819, %v825
      %v828 = vsel %vm687, %v826, 0.0
      %829 = vadd.xlane.f32.xlu0 %v828
      %v830 = vpop.xlane.xlu0 %829
      %v832 = vlaneseq
      %v833 = vshrl.u32 %v832, 7
      %v834 = vsub.s32 0, %v833
      %v835 = vrot.slane %v830, %v834
      %v836 = vlaneseq
      %v837 = vshrl.u32 %v836, 7
      %v838 = vsub.s32 1, %v837
      %v839 = vrot.slane %v830, %v838
      %v840 = vlaneseq
      %v841 = vshrl.u32 %v840, 7
      %v842 = vsub.s32 2, %v841
      %v843 = vrot.slane %v830, %v842
      %v844 = vlaneseq
      %v845 = vshrl.u32 %v844, 7
      %v846 = vsub.s32 3, %v845
      %v847 = vrot.slane %v830, %v846
      %v848 = vlaneseq
      %v849 = vshrl.u32 %v848, 7
      %v850 = vsub.s32 4, %v849
      %v851 = vrot.slane %v830, %v850
      %v852 = vlaneseq
      %v853 = vshrl.u32 %v852, 7
      %v854 = vsub.s32 5, %v853
      %v855 = vrot.slane %v830, %v854
      %v856 = vlaneseq
      %v857 = vshrl.u32 %v856, 7
      %v858 = vsub.s32 6, %v857
      %v859 = vrot.slane %v830, %v858
      %v860 = vlaneseq
      %v861 = vshrl.u32 %v860, 7
      %v862 = vsub.s32 7, %v861
      %v863 = vrot.slane %v830, %v862
      %v872 = vrcp.pop %v835
      %v873 = vmul.f32 %v741, %v872
      %v874 = vrcp.pop %v839
      %v875 = vmul.f32 %v743, %v874
      %v876 = vrcp.pop %v843
      %v877 = vmul.f32 %v745, %v876
      %v878 = vrcp.pop %v847
      %v879 = vmul.f32 %v747, %v878
      %v880 = vrcp.pop %v851
      %v881 = vmul.f32 %v749, %v880
      %v882 = vrcp.pop %v855
      %v883 = vmul.f32 %v751, %v882
      %v884 = vrcp.pop %v859
      %v885 = vmul.f32 %v753, %v884
      %v886 = vrcp.pop %v863
      %v887 = vmul.f32 %v755, %v886
      %v888 = vld [vmem:[#allocation10] sm:$0xff]
      %v889 = vld [vmem:[#allocation10 + $0x8] sm:$0xff]
      %v890 = vld [vmem:[#allocation10 + $0x10] sm:$0xff]
      %v891 = vld [vmem:[#allocation10 + $0x18] sm:$0xff]
      %v892 = vld [vmem:[#allocation10 + $0x20] sm:$0xff]
      %v893 = vld [vmem:[#allocation10 + $0x28] sm:$0xff]
      %v894 = vld [vmem:[#allocation10 + $0x30] sm:$0xff]
      %v895 = vld [vmem:[#allocation10 + $0x38] sm:$0xff]
      %897 = vset.pattern.permute.xlu0 0
      %898 = vperm.xlu0 %897, %v873
      %v899 = vpop.permute.xlu0 %898
      %902 = vset.pattern.permute.xlu0 0
      %903 = vperm.xlu0 %902, %v875
      %v904 = vpop.permute.xlu0 %903
      %907 = vset.pattern.permute.xlu0 0
      %908 = vperm.xlu0 %907, %v877
      %v909 = vpop.permute.xlu0 %908
      %912 = vset.pattern.permute.xlu0 0
      %913 = vperm.xlu0 %912, %v879
      %v914 = vpop.permute.xlu0 %913
      %917 = vset.pattern.permute.xlu0 0
      %918 = vperm.xlu0 %917, %v881
      %v919 = vpop.permute.xlu0 %918
      %922 = vset.pattern.permute.xlu0 0
      %923 = vperm.xlu0 %922, %v883
      %v924 = vpop.permute.xlu0 %923
      %927 = vset.pattern.permute.xlu0 0
      %928 = vperm.xlu0 %927, %v885
      %v929 = vpop.permute.xlu0 %928
      %932 = vset.pattern.permute.xlu0 0
      %933 = vperm.xlu0 %932, %v887
      %v934 = vpop.permute.xlu0 %933
      %v936 = vmul.f32 %v899, %v888
      %v937 = vmul.f32 %v904, %v889
      %v938 = vmul.f32 %v909, %v890
      %v939 = vmul.f32 %v914, %v891
      %v940 = vmul.f32 %v919, %v892
      %v941 = vmul.f32 %v924, %v893
      %v942 = vmul.f32 %v929, %v894
      %v943 = vmul.f32 %v934, %v895
      %v944 = vrot.slane %v936, 4
      %v945 = vadd.f32 %v936, %v944
      %v946 = vrot.slane %v945, 2
      %v947 = vadd.f32 %v945, %v946
      %v948 = vrot.slane %v947, 1
      %v949 = vadd.f32 %v947, %v948
      %v950 = vrot.slane %v937, 4
      %v951 = vadd.f32 %v937, %v950
      %v952 = vrot.slane %v951, 2
      %v953 = vadd.f32 %v951, %v952
      %v954 = vrot.slane %v953, 1
      %v955 = vadd.f32 %v953, %v954
      %v956 = vrot.slane %v938, 4
      %v957 = vadd.f32 %v938, %v956
      %v958 = vrot.slane %v957, 2
      %v959 = vadd.f32 %v957, %v958
      %v960 = vrot.slane %v959, 1
      %v961 = vadd.f32 %v959, %v960
      %v962 = vrot.slane %v939, 4
      %v963 = vadd.f32 %v939, %v962
      %v964 = vrot.slane %v963, 2
      %v965 = vadd.f32 %v963, %v964
      %v966 = vrot.slane %v965, 1
      %v967 = vadd.f32 %v965, %v966
      %v968 = vrot.slane %v940, 4
      %v969 = vadd.f32 %v940, %v968
      %v970 = vrot.slane %v969, 2
      %v971 = vadd.f32 %v969, %v970
      %v972 = vrot.slane %v971, 1
      %v973 = vadd.f32 %v971, %v972
      %v974 = vrot.slane %v941, 4
      %v975 = vadd.f32 %v941, %v974
      %v976 = vrot.slane %v975, 2
      %v977 = vadd.f32 %v975, %v976
      %v978 = vrot.slane %v977, 1
      %v979 = vadd.f32 %v977, %v978
      %v980 = vrot.slane %v942, 4
      %v981 = vadd.f32 %v942, %v980
      %v982 = vrot.slane %v981, 2
      %v983 = vadd.f32 %v981, %v982
      %v984 = vrot.slane %v983, 1
      %v985 = vadd.f32 %v983, %v984
      %v986 = vrot.slane %v943, 4
      %v987 = vadd.f32 %v943, %v986
      %v988 = vrot.slane %v987, 2
      %v989 = vadd.f32 %v987, %v988
      %v990 = vrot.slane %v989, 1
      %v991 = vadd.f32 %v989, %v990
      %s992 = smul.u32 1, 1
      %s993 = sshll.u32 %s992, 4
      %994 = dma.done [#allocation3], %s993
      %s995 = sshll.u32 %s992, 4
      %996 = dma.done %s154, %s995
      %s997 = sshll.u32 %s992, 4
      %998 = dma.done %s169, %s997
      %s999 = sshll.u32 %s992, 4
      %1000 = dma.done %s184, %s999
      %s1001 = sshll.u32 %s992, 4
      %1002 = dma.done %s199, %s1001
      %s1003 = sshll.u32 %s992, 4
      %1004 = dma.done %s214, %s1003
      %s1005 = sshll.u32 %s992, 4
      %1006 = dma.done %s229, %s1005
      %s1007 = sshll.u32 %s992, 4
      %1008 = dma.done %s244, %s1007
      %v1009 = vld [vmem:[#allocation2] sm:$0xff]
      %v1018 = vsel %vm672, %v955, %v949
      %v1019 = vsel %vm674, %v961, %v1018
      %v1020 = vsel %vm676, %v967, %v1019
      %v1021 = vsel %vm678, %v973, %v1020
      %v1022 = vsel %vm680, %v979, %v1021
      %v1023 = vsel %vm682, %v985, %v1022
      %v1024 = vsel %vm684, %v991, %v1023
      %1026 = vst [vmem:[#allocation4 + $0x8] sm:$0xff] %v1024
      %1027 = vst [vmem:[#allocation4 + $0x10] sm:$0xff] %v1009
      %v1028 = vld [vmem:[#allocation4 + $0x8] sm:$0xff]
      %v1029 = vld [vmem:[#allocation4 + $0x10] sm:$0xff]
      %v1030 = vld [vmem:[#allocation15] sm:$0xff]
      %v1031 = vld [vmem:[#allocation15 + $0x8] sm:$0xff]
      %v1032 = vld [vmem:[#allocation15 + $0x10] sm:$0xff]
      %v1033 = vld [vmem:[#allocation15 + $0x18] sm:$0xff]
      %v1034 = vld [vmem:[#allocation15 + $0x20] sm:$0xff]
      %v1035 = vld [vmem:[#allocation15 + $0x28] sm:$0xff]
      %v1036 = vld [vmem:[#allocation15 + $0x30] sm:$0xff]
      %v1037 = vld [vmem:[#allocation15 + $0x38] sm:$0xff]
      %v1038 = vld [vmem:[#allocation15 + $0x40] sm:$0xff]
      %v1039 = vld [vmem:[#allocation15 + $0x48] sm:$0xff]
      %v1040 = vld [vmem:[#allocation15 + $0x50] sm:$0xff]
      %v1041 = vld [vmem:[#allocation15 + $0x58] sm:$0xff]
      %v1042 = vld [vmem:[#allocation15 + $0x60] sm:$0xff]
      %v1043 = vld [vmem:[#allocation15 + $0x68] sm:$0xff]
      %v1044 = vld [vmem:[#allocation15 + $0x70] sm:$0xff]
      %v1045 = vld [vmem:[#allocation15 + $0x78] sm:$0xff]
      %v1046 = vld [vmem:[#allocation15 + $0x80] sm:$0xff]
      %v1047 = vld [vmem:[#allocation15 + $0x88] sm:$0xff]
      %v1048 = vld [vmem:[#allocation15 + $0x90] sm:$0xff]
      %v1049 = vld [vmem:[#allocation15 + $0x98] sm:$0xff]
      %v1050 = vld [vmem:[#allocation15 + $0xa0] sm:$0xff]
      %v1051 = vld [vmem:[#allocation15 + $0xa8] sm:$0xff]
      %v1052 = vld [vmem:[#allocation15 + $0xb0] sm:$0xff]
      %v1053 = vld [vmem:[#allocation15 + $0xb8] sm:$0xff]
      %v1054 = vld [vmem:[#allocation15 + $0xc0] sm:$0xff]
      %v1055 = vld [vmem:[#allocation15 + $0xc8] sm:$0xff]
      %v1056 = vld [vmem:[#allocation15 + $0xd0] sm:$0xff]
      %v1057 = vld [vmem:[#allocation15 + $0xd8] sm:$0xff]
      %v1058 = vld [vmem:[#allocation15 + $0xe0] sm:$0xff]
      %v1059 = vld [vmem:[#allocation15 + $0xe8] sm:$0xff]
      %v1060 = vld [vmem:[#allocation15 + $0xf0] sm:$0xff]
      %v1061 = vld [vmem:[#allocation15 + $0xf8] sm:$0xff]
      %v1062 = vld [vmem:[#allocation15 + $0x100] sm:$0xff]
      %v1063 = vld [vmem:[#allocation15 + $0x108] sm:$0xff]
      %v1064 = vld [vmem:[#allocation15 + $0x110] sm:$0xff]
      %v1065 = vld [vmem:[#allocation15 + $0x118] sm:$0xff]
      %v1066 = vld [vmem:[#allocation15 + $0x120] sm:$0xff]
      %v1067 = vld [vmem:[#allocation15 + $0x128] sm:$0xff]
      %v1068 = vld [vmem:[#allocation15 + $0x130] sm:$0xff]
      %v1069 = vld [vmem:[#allocation15 + $0x138] sm:$0xff]
      %v1070 = vld [vmem:[#allocation15 + $0x140] sm:$0xff]
      %v1071 = vld [vmem:[#allocation15 + $0x148] sm:$0xff]
      %v1072 = vld [vmem:[#allocation15 + $0x150] sm:$0xff]
      %v1073 = vld [vmem:[#allocation15 + $0x158] sm:$0xff]
      %v1074 = vld [vmem:[#allocation15 + $0x160] sm:$0xff]
      %v1075 = vld [vmem:[#allocation15 + $0x168] sm:$0xff]
      %v1076 = vld [vmem:[#allocation15 + $0x170] sm:$0xff]
      %v1077 = vld [vmem:[#allocation15 + $0x178] sm:$0xff]
      %v1078 = vld [vmem:[#allocation15 + $0x180] sm:$0xff]
      %v1079 = vld [vmem:[#allocation15 + $0x188] sm:$0xff]
      %v1080 = vld [vmem:[#allocation15 + $0x190] sm:$0xff]
      %v1081 = vld [vmem:[#allocation15 + $0x198] sm:$0xff]
      %v1082 = vld [vmem:[#allocation15 + $0x1a0] sm:$0xff]
      %v1083 = vld [vmem:[#allocation15 + $0x1a8] sm:$0xff]
      %v1084 = vld [vmem:[#allocation15 + $0x1b0] sm:$0xff]
      %v1085 = vld [vmem:[#allocation15 + $0x1b8] sm:$0xff]
      %v1086 = vld [vmem:[#allocation15 + $0x1c0] sm:$0xff]
      %v1087 = vld [vmem:[#allocation15 + $0x1c8] sm:$0xff]
      %v1088 = vld [vmem:[#allocation15 + $0x1d0] sm:$0xff]
      %v1089 = vld [vmem:[#allocation15 + $0x1d8] sm:$0xff]
      %v1090 = vld [vmem:[#allocation15 + $0x1e0] sm:$0xff]
      %v1091 = vld [vmem:[#allocation15 + $0x1e8] sm:$0xff]
      %v1092 = vld [vmem:[#allocation15 + $0x1f0] sm:$0xff]
      %v1093 = vld [vmem:[#allocation15 + $0x1f8] sm:$0xff]
      %v1094 = vld [vmem:[#allocation15 + $0x200] sm:$0xff]
      %v1095 = vld [vmem:[#allocation15 + $0x208] sm:$0xff]
      %v1096 = vld [vmem:[#allocation15 + $0x210] sm:$0xff]
      %v1097 = vld [vmem:[#allocation15 + $0x218] sm:$0xff]
      %v1098 = vld [vmem:[#allocation15 + $0x220] sm:$0xff]
      %v1099 = vld [vmem:[#allocation15 + $0x228] sm:$0xff]
      %v1100 = vld [vmem:[#allocation15 + $0x230] sm:$0xff]
      %v1101 = vld [vmem:[#allocation15 + $0x238] sm:$0xff]
      %v1102 = vld [vmem:[#allocation15 + $0x240] sm:$0xff]
      %v1103 = vld [vmem:[#allocation15 + $0x248] sm:$0xff]
      %v1104 = vld [vmem:[#allocation15 + $0x250] sm:$0xff]
      %v1105 = vld [vmem:[#allocation15 + $0x258] sm:$0xff]
      %v1106 = vld [vmem:[#allocation15 + $0x260] sm:$0xff]
      %v1107 = vld [vmem:[#allocation15 + $0x268] sm:$0xff]
      %v1108 = vld [vmem:[#allocation15 + $0x270] sm:$0xff]
      %v1109 = vld [vmem:[#allocation15 + $0x278] sm:$0xff]
      %v1110 = vld [vmem:[#allocation15 + $0x280] sm:$0xff]
      %v1111 = vld [vmem:[#allocation15 + $0x288] sm:$0xff]
      %v1112 = vld [vmem:[#allocation15 + $0x290] sm:$0xff]
      %v1113 = vld [vmem:[#allocation15 + $0x298] sm:$0xff]
      %v1114 = vld [vmem:[#allocation15 + $0x2a0] sm:$0xff]
      %v1115 = vld [vmem:[#allocation15 + $0x2a8] sm:$0xff]
      %v1116 = vld [vmem:[#allocation15 + $0x2b0] sm:$0xff]
      %v1117 = vld [vmem:[#allocation15 + $0x2b8] sm:$0xff]
      %v1118 = vld [vmem:[#allocation15 + $0x2c0] sm:$0xff]
      %v1119 = vld [vmem:[#allocation15 + $0x2c8] sm:$0xff]
      %v1120 = vld [vmem:[#allocation15 + $0x2d0] sm:$0xff]
      %v1121 = vld [vmem:[#allocation15 + $0x2d8] sm:$0xff]
      %v1122 = vld [vmem:[#allocation15 + $0x2e0] sm:$0xff]
      %v1123 = vld [vmem:[#allocation15 + $0x2e8] sm:$0xff]
      %v1124 = vld [vmem:[#allocation15 + $0x2f0] sm:$0xff]
      %v1125 = vld [vmem:[#allocation15 + $0x2f8] sm:$0xff]
      %v1126 = vld [vmem:[%s9] sm:$0x7]
      %v1128 = vlaneseq
      %v1129 = vshrl.u32 %v1128, 7
      %v1130 = vsub.s32 0, %v1129
      %v1131 = vrot.slane %v1126, %v1130
      %v1132 = vlaneseq
      %v1133 = vshrl.u32 %v1132, 7
      %v1134 = vsub.s32 1, %v1133
      %v1135 = vrot.slane %v1126, %v1134
      %v1136 = vlaneseq
      %v1137 = vshrl.u32 %v1136, 7
      %v1138 = vsub.s32 2, %v1137
      %v1139 = vrot.slane %v1126, %v1138
      %1143 = vmatprep.subr.mxu0 %v1031
      %1144 = vmatpush1.msra.mxu0 %v1030
      %1145 = vmatprep.subr.mxu0 %v1034
      %1146 = vmatpush1.msra.mxu0 %v1033
      %1147 = vmatprep.subr.mxu0 %v1037
      %1148 = vmatpush1.msra.mxu0 %v1036
      %1149 = vmatprep.subr.mxu0 %v1040
      %1150 = vmatpush1.msra.mxu0 %v1039
      %1151 = vmatprep.subr.mxu0 %v1043
      %1152 = vmatpush1.msra.mxu0 %v1042
      %1153 = vmatprep.subr.mxu0 %v1046
      %1154 = vmatpush1.msra.mxu0 %v1045
      %1155 = vmatprep.subr.mxu0 %v1049
      %1156 = vmatpush1.msra.mxu0 %v1048
      %1157 = vmatprep.subr.mxu0 %v1052
      %1158 = vmatpush1.msra.mxu0 %v1051
      %1159 = vmatprep.subr.mxu0 %v1055
      %1160 = vmatpush1.msra.mxu0 %v1054
      %1161 = vmatprep.subr.mxu0 %v1058
      %1162 = vmatpush1.msra.mxu0 %v1057
      %1163 = vmatprep.subr.mxu0 %v1061
      %1164 = vmatpush1.msra.mxu0 %v1060
      %1165 = vmatprep.subr.mxu0 %v1064
      %1166 = vmatpush1.msra.mxu0 %v1063
      %1167 = vmatprep.subr.mxu0 %v1067
      %1168 = vmatpush1.msra.mxu0 %v1066
      %1169 = vmatprep.subr.mxu0 %v1070
      %1170 = vmatpush1.msra.mxu0 %v1069
      %1171 = vmatprep.subr.mxu0 %v1073
      %1172 = vmatpush1.msra.mxu0 %v1072
      %1173 = vmatprep.subr.mxu0 %v1076
      %1174 = vmatpush1.msra.mxu0 %v1075
      %1175 = vmatprep.subr.mxu0 %v1079
      %1176 = vmatpush1.msra.mxu0 %v1078
      %1177 = vmatprep.subr.mxu0 %v1082
      %1178 = vmatpush1.msra.mxu0 %v1081
      %1179 = vmatprep.subr.mxu0 %v1085
      %1180 = vmatpush1.msra.mxu0 %v1084
      %1181 = vmatprep.subr.mxu0 %v1088
      %1182 = vmatpush1.msra.mxu0 %v1087
      %1183 = vmatprep.subr.mxu0 %v1091
      %1184 = vmatpush1.msra.mxu0 %v1090
      %1185 = vmatprep.subr.mxu0 %v1094
      %1186 = vmatpush1.msra.mxu0 %v1093
      %1187 = vmatprep.subr.mxu0 %v1097
      %1188 = vmatpush1.msra.mxu0 %v1096
      %1189 = vmatprep.subr.mxu0 %v1100
      %1190 = vmatpush1.msra.mxu0 %v1099
      %1191 = vmatprep.subr.mxu0 %v1103
      %1192 = vmatpush1.msra.mxu0 %v1102
      %1193 = vmatprep.subr.mxu0 %v1106
      %1194 = vmatpush1.msra.mxu0 %v1105
      %1195 = vmatprep.subr.mxu0 %v1109
      %1196 = vmatpush1.msra.mxu0 %v1108
      %1197 = vmatprep.subr.mxu0 %v1112
      %1198 = vmatpush1.msra.mxu0 %v1111
      %1199 = vmatprep.subr.mxu0 %v1115
      %1200 = vmatpush1.msra.mxu0 %v1114
      %1201 = vmatprep.subr.mxu0 %v1118
      %1202 = vmatpush1.msra.mxu0 %v1117
      %1203 = vmatprep.subr.mxu0 %v1121
      %1204 = vmatpush1.msra.mxu0 %v1120
      %1205 = vmatprep.subr.mxu0 %v1124
      %1206 = vmatpush1.msra.mxu0 %v1123
      %1207 = vmatprep.mubr.f32.mxu0 %v1029
      %1208 = vmatmul.mubr.f32.gmra.mrb[0].mxu0 %v1028
      %v1209 = vpop.f32.mrb[0].mxu0
      %v1210 = vadd.f32 %v1131, %v1209
      %v1211 = vpop.f32.mrb[0].mxu0
      %v1212 = vadd.f32 %v1135, %v1211
      %1213 = vdwg.mxu0
      %1214 = vmatprep.subr.mxu0 0.0
      %1215 = vmatpush1.msra.mxu0 %v1032
      %1216 = vmatprep.subr.mxu0 0.0
      %1217 = vmatpush1.msra.mxu0 %v1035
      %1218 = vmatprep.subr.mxu0 0.0
      %1219 = vmatpush1.msra.mxu0 %v1038
      %1220 = vmatprep.subr.mxu0 0.0
      %1221 = vmatpush1.msra.mxu0 %v1041
      %1222 = vmatprep.subr.mxu0 0.0
      %1223 = vmatpush1.msra.mxu0 %v1044
      %1224 = vmatprep.subr.mxu0 0.0
      %1225 = vmatpush1.msra.mxu0 %v1047
      %1226 = vmatprep.subr.mxu0 0.0
      %1227 = vmatpush1.msra.mxu0 %v1050
      %1228 = vmatprep.subr.mxu0 0.0
      %1229 = vmatpush1.msra.mxu0 %v1053
      %1230 = vmatprep.subr.mxu0 0.0
      %1231 = vmatpush1.msra.mxu0 %v1056
      %1232 = vmatprep.subr.mxu0 0.0
      %1233 = vmatpush1.msra.mxu0 %v1059
      %1234 = vmatprep.subr.mxu0 0.0
      %1235 = vmatpush1.msra.mxu0 %v1062
      %1236 = vmatprep.subr.mxu0 0.0
      %1237 = vmatpush1.msra.mxu0 %v1065
      %1238 = vmatprep.subr.mxu0 0.0
      %1239 = vmatpush1.msra.mxu0 %v1068
      %1240 = vmatprep.subr.mxu0 0.0
      %1241 = vmatpush1.msra.mxu0 %v1071
      %1242 = vmatprep.subr.mxu0 0.0
      %1243 = vmatpush1.msra.mxu0 %v1074
      %1244 = vmatprep.subr.mxu0 0.0
      %1245 = vmatpush1.msra.mxu0 %v1077
      %1246 = vmatprep.subr.mxu0 0.0
      %1247 = vmatpush1.msra.mxu0 %v1080
      %1248 = vmatprep.subr.mxu0 0.0
      %1249 = vmatpush1.msra.mxu0 %v1083
      %1250 = vmatprep.subr.mxu0 0.0
      %1251 = vmatpush1.msra.mxu0 %v1086
      %1252 = vmatprep.subr.mxu0 0.0
      %1253 = vmatpush1.msra.mxu0 %v1089
      %1254 = vmatprep.subr.mxu0 0.0
      %1255 = vmatpush1.msra.mxu0 %v1092
      %1256 = vmatprep.subr.mxu0 0.0
      %1257 = vmatpush1.msra.mxu0 %v1095
      %1258 = vmatprep.subr.mxu0 0.0
      %1259 = vmatpush1.msra.mxu0 %v1098
      %1260 = vmatprep.subr.mxu0 0.0
      %1261 = vmatpush1.msra.mxu0 %v1101
      %1262 = vmatprep.subr.mxu0 0.0
      %1263 = vmatpush1.msra.mxu0 %v1104
      %1264 = vmatprep.subr.mxu0 0.0
      %1265 = vmatpush1.msra.mxu0 %v1107
      %1266 = vmatprep.subr.mxu0 0.0
      %1267 = vmatpush1.msra.mxu0 %v1110
      %1268 = vmatprep.subr.mxu0 0.0
      %1269 = vmatpush1.msra.mxu0 %v1113
      %1270 = vmatprep.subr.mxu0 0.0
      %1271 = vmatpush1.msra.mxu0 %v1116
      %1272 = vmatprep.subr.mxu0 0.0
      %1273 = vmatpush1.msra.mxu0 %v1119
      %1274 = vmatprep.subr.mxu0 0.0
      %1275 = vmatpush1.msra.mxu0 %v1122
      %1276 = vmatprep.subr.mxu0 0.0
      %1277 = vmatpush1.msra.mxu0 %v1125
      %1278 = vmatprep.mubr.f32.mxu0 %v1029
      %1279 = vmatmul.mubr.f32.gmra.mrb[0].mxu0 %v1028
      %v1280 = vpop.f32.mrb[0].mxu0
      %v1281 = vadd.f32 %v1139, %v1280
      %v1282 = vpop.f32.mrb[0].mxu0
      %1283 = vdwg.mxu0
      %v1284 = vadd.f32 %v1210, %v412
      %v1285 = vxor.u32 %v1284, 2147483648
      %v1286 = vmul.f32 %v1285, 1.442695
      %v1287 = vpow.pop %v1286
      %v1288 = vadd.f32 %v1287, 1.0
      %v1289 = vrcp.pop %v1288
      %v1290 = vmul.f32 1.0, %v1289
      %v1291 = vadd.f32 %v1212, %v481
      %v1292 = vxor.u32 %v1291, 2147483648
      %v1293 = vmul.f32 %v1292, 1.442695
      %v1294 = vpow.pop %v1293
      %v1295 = vadd.f32 %v1294, 1.0
      %v1296 = vrcp.pop %v1295
      %v1297 = vmul.f32 1.0, %v1296
      %v1298 = vmul.f32 %v1290, %v483
      %v1299 = vadd.f32 %v1281, %v1298
      %v1300 = vtanh.pop %v1299
      %v1301 = vsub.f32 1.0, %v1297
      %v1302 = vmul.f32 %v1301, %v1300
      %v1303 = vmul.f32 %v1297, %v256
      %v1304 = vadd.f32 %v1302, %v1303
      %1305 = vst [vmem:[#allocation19] sm:$0xff] %v1304
      %1306 = vst [vmem:[#allocation4] sm:$0xff] %v1304
    $region69: #{tpu_custom_call.1} parent=1 // pred_fallthru
      _
    %v1307 = vld [vmem:[#allocation4] sm:$0xff]
    %v1308 = vld [vmem:[#allocation4 + $0x8] sm:$0xff]
    %v1309 = vld [vmem:[#allocation4 + $0x10] sm:$0xff]
    %v1310 = vpack.c.bf16 %v1307, %v1307
    %v1311 = vpack.c.bf16 %v1308, %v1308
    %v1312 = vpack.c.bf16 %v1309, %v1309
    %v1313 = vld [vmem:[#allocation16] sm:$0xf]
    %v1314 = vld [vmem:[#allocation16 + $0x4] sm:$0xf]
    %v1315 = vld [vmem:[#allocation16 + $0x8] sm:$0xf]
    %v1316 = vld [vmem:[#allocation16 + $0xc] sm:$0xf]
    %v1317 = vld [vmem:[#allocation16 + $0x10] sm:$0xf]
    %v1318 = vld [vmem:[#allocation16 + $0x14] sm:$0xf]
    %v1319 = vld [vmem:[#allocation16 + $0x18] sm:$0xf]
    %v1320 = vld [vmem:[#allocation16 + $0x1c] sm:$0xf]
    %v1321 = vld [vmem:[#allocation16 + $0x20] sm:$0xf]
    %v1322 = vld [vmem:[#allocation16 + $0x24] sm:$0xf]
    %v1323 = vld [vmem:[#allocation16 + $0x28] sm:$0xf]
    %v1324 = vld [vmem:[#allocation16 + $0x2c] sm:$0xf]
    %v1325 = vld [vmem:[#allocation16 + $0x30] sm:$0xf]
    %v1326 = vld [vmem:[#allocation16 + $0x34] sm:$0xf]
    %v1327 = vld [vmem:[#allocation16 + $0x38] sm:$0xf]
    %v1328 = vld [vmem:[#allocation16 + $0x3c] sm:$0xf]
    %v1329 = vld [vmem:[#allocation16 + $0x40] sm:$0xf]
    %v1330 = vld [vmem:[#allocation16 + $0x44] sm:$0xf]
    %v1331 = vld [vmem:[#allocation16 + $0x48] sm:$0xf]
    %v1332 = vld [vmem:[#allocation16 + $0x4c] sm:$0xf]
    %v1333 = vld [vmem:[#allocation16 + $0x50] sm:$0xf]
    %v1334 = vld [vmem:[#allocation16 + $0x54] sm:$0xf]
    %v1335 = vld [vmem:[#allocation16 + $0x58] sm:$0xf]
    %v1336 = vld [vmem:[#allocation16 + $0x5c] sm:$0xf]
    %v1337 = vld [vmem:[#allocation16 + $0x60] sm:$0xf]
    %v1338 = vld [vmem:[#allocation16 + $0x64] sm:$0xf]
    %v1339 = vld [vmem:[#allocation16 + $0x68] sm:$0xf]
    %v1340 = vld [vmem:[#allocation16 + $0x6c] sm:$0xf]
    %v1341 = vld [vmem:[#allocation16 + $0x70] sm:$0xf]
    %v1342 = vld [vmem:[#allocation16 + $0x74] sm:$0xf]
    %v1343 = vld [vmem:[#allocation16 + $0x78] sm:$0xf]
    %v1344 = vld [vmem:[#allocation16 + $0x7c] sm:$0xf]
    %v1345 = vld [vmem:[#allocation16 + $0x80] sm:$0xf]
    %v1346 = vld [vmem:[#allocation16 + $0x84] sm:$0xf]
    %v1347 = vld [vmem:[#allocation16 + $0x88] sm:$0xf]
    %v1348 = vld [vmem:[#allocation16 + $0x8c] sm:$0xf]
    %v1349 = vld [vmem:[#allocation16 + $0x90] sm:$0xf]
    %v1350 = vld [vmem:[#allocation16 + $0x94] sm:$0xf]
    %v1351 = vld [vmem:[#allocation16 + $0x98] sm:$0xf]
    %v1352 = vld [vmem:[#allocation16 + $0x9c] sm:$0xf]
    %v1353 = vld [vmem:[#allocation16 + $0xa0] sm:$0xf]
    %v1354 = vld [vmem:[#allocation16 + $0xa4] sm:$0xf]
    %v1355 = vld [vmem:[#allocation16 + $0xa8] sm:$0xf]
    %v1356 = vld [vmem:[#allocation16 + $0xac] sm:$0xf]
    %v1357 = vld [vmem:[#allocation16 + $0xb0] sm:$0xf]
    %v1358 = vld [vmem:[#allocation16 + $0xb4] sm:$0xf]
    %v1359 = vld [vmem:[#allocation16 + $0xb8] sm:$0xf]
    %v1360 = vld [vmem:[#allocation16 + $0xbc] sm:$0xf]
    %v1361 = vld [vmem:[%s11] sm:$0x1]
    %v1363 = vlaneseq
    %v1364 = vshrl.u32 %v1363, 7
    %v1365 = vsub.s32 0, %v1364
    %v1366 = vrot.slane %v1361, %v1365
    %v1416 = vunpack.c.l.b16 %v1313
    %v1417 = vunpack.c.l.b16 %v1314
    %v1418 = vunpack.c.l.b16 %v1315
    %v1419 = vunpack.c.l.b16 %v1316
    %v1420 = vunpack.c.l.b16 %v1317
    %v1421 = vunpack.c.l.b16 %v1318
    %v1422 = vunpack.c.l.b16 %v1319
    %v1423 = vunpack.c.l.b16 %v1320
    %v1424 = vunpack.c.l.b16 %v1321
    %v1425 = vunpack.c.l.b16 %v1322
    %v1426 = vunpack.c.l.b16 %v1323
    %v1427 = vunpack.c.l.b16 %v1324
    %v1428 = vunpack.c.l.b16 %v1325
    %v1429 = vunpack.c.l.b16 %v1326
    %v1430 = vunpack.c.l.b16 %v1327
    %v1431 = vunpack.c.l.b16 %v1328
    %v1432 = vunpack.c.l.b16 %v1329
    %v1433 = vunpack.c.l.b16 %v1330
    %v1434 = vunpack.c.l.b16 %v1331
    %v1435 = vunpack.c.l.b16 %v1332
    %v1436 = vunpack.c.l.b16 %v1333
    %v1437 = vunpack.c.l.b16 %v1334
    %v1438 = vunpack.c.l.b16 %v1335
    %v1439 = vunpack.c.l.b16 %v1336
    %v1440 = vunpack.c.l.b16 %v1337
    %v1441 = vunpack.c.l.b16 %v1338
    %v1442 = vunpack.c.l.b16 %v1339
    %v1443 = vunpack.c.l.b16 %v1340
    %v1444 = vunpack.c.l.b16 %v1341
    %v1445 = vunpack.c.l.b16 %v1342
    %v1446 = vunpack.c.l.b16 %v1343
    %v1447 = vunpack.c.l.b16 %v1344
    %v1448 = vunpack.c.l.b16 %v1345
    %v1449 = vunpack.c.l.b16 %v1346
    %v1450 = vunpack.c.l.b16 %v1347
    %v1451 = vunpack.c.l.b16 %v1348
    %v1452 = vunpack.c.l.b16 %v1349
    %v1453 = vunpack.c.l.b16 %v1350
    %v1454 = vunpack.c.l.b16 %v1351
    %v1455 = vunpack.c.l.b16 %v1352
    %v1456 = vunpack.c.l.b16 %v1353
    %v1457 = vunpack.c.l.b16 %v1354
    %v1458 = vunpack.c.l.b16 %v1355
    %v1459 = vunpack.c.l.b16 %v1356
    %v1460 = vunpack.c.l.b16 %v1357
    %v1461 = vunpack.c.l.b16 %v1358
    %v1462 = vunpack.c.l.b16 %v1359
    %v1463 = vunpack.c.l.b16 %v1360
    %v1464 = vpack.c.b16 %v1417, %v1416
    %v1465 = vpack.c.b16 %v1419, %v1418
    %v1466 = vpack.c.b16 %v1421, %v1420
    %v1467 = vpack.c.b16 %v1423, %v1422
    %v1468 = vpack.c.b16 %v1425, %v1424
    %v1469 = vpack.c.b16 %v1427, %v1426
    %v1470 = vpack.c.b16 %v1429, %v1428
    %v1471 = vpack.c.b16 %v1431, %v1430
    %v1472 = vpack.c.b16 %v1433, %v1432
    %v1473 = vpack.c.b16 %v1435, %v1434
    %v1474 = vpack.c.b16 %v1437, %v1436
    %v1475 = vpack.c.b16 %v1439, %v1438
    %v1476 = vpack.c.b16 %v1441, %v1440
    %v1477 = vpack.c.b16 %v1443, %v1442
    %v1478 = vpack.c.b16 %v1445, %v1444
    %v1479 = vpack.c.b16 %v1447, %v1446
    %v1480 = vpack.c.b16 %v1449, %v1448
    %v1481 = vpack.c.b16 %v1451, %v1450
    %v1482 = vpack.c.b16 %v1453, %v1452
    %v1483 = vpack.c.b16 %v1455, %v1454
    %v1484 = vpack.c.b16 %v1457, %v1456
    %v1485 = vpack.c.b16 %v1459, %v1458
    %v1486 = vpack.c.b16 %v1461, %v1460
    %v1487 = vpack.c.b16 %v1463, %v1462
    %1512 = vmatprep.subr.bf16.mxu0 0
    %1513 = vmatpush1.bf16.msra.mxu0 %v1464
    %1514 = vmatprep.subr.bf16.mxu0 0
    %1515 = vmatpush1.bf16.msra.mxu0 %v1465
    %1516 = vmatprep.subr.bf16.mxu0 0
    %1517 = vmatpush1.bf16.msra.mxu0 %v1466
    %1518 = vmatprep.subr.bf16.mxu0 0
    %1519 = vmatpush1.bf16.msra.mxu0 %v1467
    %1520 = vmatprep.subr.bf16.mxu0 0
    %1521 = vmatpush1.bf16.msra.mxu0 %v1468
    %1522 = vmatprep.subr.bf16.mxu0 0
    %1523 = vmatpush1.bf16.msra.mxu0 %v1469
    %1524 = vmatprep.subr.bf16.mxu0 0
    %1525 = vmatpush1.bf16.msra.mxu0 %v1470
    %1526 = vmatprep.subr.bf16.mxu0 0
    %1527 = vmatpush1.bf16.msra.mxu0 %v1471
    %1528 = vmatprep.subr.bf16.mxu0 0
    %1529 = vmatpush1.bf16.msra.mxu0 %v1472
    %1530 = vmatprep.subr.bf16.mxu0 0
    %1531 = vmatpush1.bf16.msra.mxu0 %v1473
    %1532 = vmatprep.subr.bf16.mxu0 0
    %1533 = vmatpush1.bf16.msra.mxu0 %v1474
    %1534 = vmatprep.subr.bf16.mxu0 0
    %1535 = vmatpush1.bf16.msra.mxu0 %v1475
    %1536 = vmatprep.subr.bf16.mxu0 0
    %1537 = vmatpush1.bf16.msra.mxu0 %v1476
    %1538 = vmatprep.subr.bf16.mxu0 0
    %1539 = vmatpush1.bf16.msra.mxu0 %v1477
    %1540 = vmatprep.subr.bf16.mxu0 0
    %1541 = vmatpush1.bf16.msra.mxu0 %v1478
    %1542 = vmatprep.subr.bf16.mxu0 0
    %1543 = vmatpush1.bf16.msra.mxu0 %v1479
    %1544 = vmatprep.mubr.bf16.mxu0 %v1311
    %1545 = vmatmul.mubr.bf16.gmra.mrb[0].mxu0 %v1310
    %v1546 = vpop.f32.mrb[0].mxu0
    %v1547 = vadd.f32 %v1366, %v1546
    %v1548 = vpop.f32.mrb[0].mxu0
    %v1549 = vpop.f32.mrb[0].mxu0
    %v1550 = vpop.f32.mrb[0].mxu0
    %1551 = vdwg.mxu0
    %1552 = vmatprep.subr.bf16.mxu0 0
    %1553 = vmatpush1.bf16.msra.mxu0 %v1480
    %1554 = vmatprep.subr.bf16.mxu0 0
    %1555 = vmatpush1.bf16.msra.mxu0 %v1481
    %1556 = vmatprep.subr.bf16.mxu0 0
    %1557 = vmatpush1.bf16.msra.mxu0 %v1482
    %1558 = vmatprep.subr.bf16.mxu0 0
    %1559 = vmatpush1.bf16.msra.mxu0 %v1483
    %1560 = vmatprep.subr.bf16.mxu0 0
    %1561 = vmatpush1.bf16.msra.mxu0 %v1484
    %1562 = vmatprep.subr.bf16.mxu0 0
    %1563 = vmatpush1.bf16.msra.mxu0 %v1485
    %1564 = vmatprep.subr.bf16.mxu0 0
    %1565 = vmatpush1.bf16.msra.mxu0 %v1486
    %1566 = vmatprep.subr.bf16.mxu0 0
    %1567 = vmatpush1.bf16.msra.mxu0 %v1487
    %1568 = vmatprep.subr.bf16.mxu0 0
    %1569 = vmatpush1.bf16.msra.mxu0 0
    %1570 = vmatprep.subr.bf16.mxu0 0
    %1571 = vmatpush1.bf16.msra.mxu0 0
    %1572 = vmatprep.subr.bf16.mxu0 0
    %1573 = vmatpush1.bf16.msra.mxu0 0
    %1574 = vmatprep.subr.bf16.mxu0 0
    %1575 = vmatpush1.bf16.msra.mxu0 0
    %1576 = vmatprep.subr.bf16.mxu0 0
    %1577 = vmatpush1.bf16.msra.mxu0 0
    %1578 = vmatprep.subr.bf16.mxu0 0
    %1579 = vmatpush1.bf16.msra.mxu0 0
    %1580 = vmatprep.subr.bf16.mxu0 0
    %1581 = vmatpush1.bf16.msra.mxu0 0
    %1582 = vmatprep.subr.bf16.mxu0 0
    %1583 = vmatpush1.bf16.msra.mxu0 0
    %1584 = vmatprep.mubr.bf16.mxu0 0
    %1585 = vmatmul.mubr.bf16.gmra.mrb[0].mxu0 %v1312
    %v1586 = vpop.f32.mrb[0].mxu0
    %v1587 = vadd.f32 %v1547, %v1586
    %v1588 = vpop.f32.mrb[0].mxu0
    %v1589 = vpop.f32.mrb[0].mxu0
    %v1590 = vpop.f32.mrb[0].mxu0
    %1591 = vdwg.mxu0
    %1592 = vst [vmem:[#allocation18] sm:$0xff] %v1587
    // Predicated region
    $region102: #{tpu_custom_call.1} parent=1 // pred_check
      _
    $region103: #{tpu_custom_call.1} parent=1 // pred_check_branch
      %1594 = sbr.rel (0) target = $region105
    $region104: #{tpu_custom_call.1} parent=1 // pred_region
      %s1596 = ssub.s32 128, 128
      %1597 = vsyncadd [#allocation9], %s1596
      %s1599 = sshll.u32 [#allocation18], 4
      %s1600 = int_to_ptr.vmem [resolvable:$true] %s1599
      %1602 = dma.vmem_to_hbm [thread:$0]  %s1600, 128, %s12, [#allocation9]
    $region105: #{tpu_custom_call.1} parent=1 // pred_fallthru
      _
    // Predicated region
    $region106: #{tpu_custom_call.1} parent=1 // pred_check
      _
    $region107: #{tpu_custom_call.1} parent=1 // pred_check_branch
      %1604 = sbr.rel (0) target = $region109
    $region108: #{tpu_custom_call.1} parent=1 // pred_region
      %s1606 = ssub.s32 128, 128
      %1607 = vsyncadd [#allocation20], %s1606
      %s1609 = sshll.u32 [#allocation19], 4
      %s1610 = int_to_ptr.vmem [resolvable:$true] %s1609
      %1612 = dma.vmem_to_hbm [thread:$0]  %s1610, 128, %s13, [#allocation20]
    $region109: #{tpu_custom_call.1} parent=1 // pred_fallthru
      _
    // Predicated region
    $region110: #{tpu_custom_call.1} parent=1 // pred_check
      _
    $region111: #{tpu_custom_call.1} parent=1 // pred_check_branch
      %1614 = sbr.rel (0) target = $region113
    $region112: #{tpu_custom_call.1} parent=1 // pred_region
      %1615 = dma.done [#allocation9], 128
    $region113: #{tpu_custom_call.1} parent=1 // pred_fallthru
      _
    // Predicated region
    $region114: #{tpu_custom_call.1} parent=1 // pred_check
      _
    $region115: #{tpu_custom_call.1} parent=1 // pred_check_branch
      %1617 = sbr.rel (0) target = $region117
    $region116: #{tpu_custom_call.1} parent=1 // pred_region
      %1618 = dma.done [#allocation20], 128
    $region117: #{tpu_custom_call.1} parent=1 // pred_fallthru
      _
    %1619 = vsyncpa [#allocation8], 1
    %1620 = vsyncpa [#allocation11], 1
    %1621 = vsyncpa [#allocation14], 1
    %1622 = vsyncpa [#allocation17], 1
    %1623 = vsyncpa [#allocation9], 1
    %1624 = vsyncpa [#allocation20], 1
  %1625 = vsyncmov [#allocation3]
  %s1626 = vpop.sfrf %1625
  %p1627 = scmp.eq.s32.totalorder %s1626, 0
  %p1628 = pneg %p1627
  %1630 = shalt.err (%p1628)
  %s1631 = scalar_lea.sflag [#allocation3], 1
  %1632 = vsyncmov %s1631
  %s1633 = vpop.sfrf %1632
  %p1634 = scmp.eq.s32.totalorder %s1633, 0
  %p1635 = pneg %p1634
  %1637 = shalt.err (%p1635)
  %s1638 = scalar_lea.sflag [#allocation3], 2
  %1639 = vsyncmov %s1638
  %s1640 = vpop.sfrf %1639
  %p1641 = scmp.eq.s32.totalorder %s1640, 0
  %p1642 = pneg %p1641
  %1644 = shalt.err (%p1642)
  %s1645 = scalar_lea.sflag [#allocation3], 3
  %1646 = vsyncmov %s1645
  %s1647 = vpop.sfrf %1646
  %p1648 = scmp.eq.s32.totalorder %s1647, 0
  %p1649 = pneg %p1648
  %1651 = shalt.err (%p1649)
  %s1652 = scalar_lea.sflag [#allocation3], 4
  %1653 = vsyncmov %s1652
  %s1654 = vpop.sfrf %1653
  %p1655 = scmp.eq.s32.totalorder %s1654, 0
  %p1656 = pneg %p1655
  %1658 = shalt.err (%p1656)
  %s1659 = scalar_lea.sflag [#allocation3], 5
  %1660 = vsyncmov %s1659
  %s1661 = vpop.sfrf %1660
  %p1662 = scmp.eq.s32.totalorder %s1661, 0
  %p1663 = pneg %p1662
  %1665 = shalt.err (%p1663)
  %s1666 = scalar_lea.sflag [#allocation3], 6
  %1667 = vsyncmov %s1666
  %s1668 = vpop.sfrf %1667
  %p1669 = scmp.eq.s32.totalorder %s1668, 0
  %p1670 = pneg %p1669
  %1672 = shalt.err (%p1670)
  %s1673 = scalar_lea.sflag [#allocation3], 7
  %1674 = vsyncmov %s1673
  %s1675 = vpop.sfrf %1674
  %p1676 = scmp.eq.s32.totalorder %s1675, 0
  %p1677 = pneg %p1676
  %1679 = shalt.err (%p1677)

</llo_original>
